<compile_context>
chip_gen: v5e
topology: v5e:2x2
jax: 0.10.0
libtpu: 0.0.40
codegen_flags: <defaults>
</compile_context>

<pallas_src>
import jax
import jax.numpy as jnp
from jax import lax
from jax.experimental import pallas as pl
from jax.experimental.pallas import tpu as pltpu


def head_kernel(x_ref, wqkv_ref, o_ref):
    # x_ref:    (bb, T, C)   block of batch rows
    # wqkv_ref: (C, 3H)      fused [q | k | v] projection weights
    # o_ref:    (bb, T, H)
    bb, T, C = x_ref.shape
    H = o_ref.shape[-1]
    mm_dtype = x_ref.dtype  # bf16 inputs -> bf16 MXU; f32 inputs -> f32 passes

    # ---- fused QKV projection: one big MXU matmul over all bb*T rows -------
    x2 = x_ref[...].reshape(bb * T, C)                      # leading-dim merge (free)
    qkv = jnp.dot(x2, wqkv_ref[...],
                  preferred_element_type=jnp.float32)       # (bb*T, 3H) f32
    qkv = qkv.reshape(bb, T, 3 * H)

    scale = jnp.float32(H) ** -0.5
    q = (qkv[..., 0 * H:1 * H] * scale).astype(mm_dtype)    # scale folded into q
    k = qkv[..., 1 * H:2 * H].astype(mm_dtype)
    v = qkv[..., 2 * H:3 * H].astype(mm_dtype)

    # ---- attention scores: contract on H, batched over bb (no k transpose) -
    wei = jnp.einsum('bqh,bkh->bqk', q, k,
                     preferred_element_type=jnp.float32)    # (bb, T, T) f32

    # causal mask (tril); diagonal always unmasked so no all -inf rows
    row = lax.broadcasted_iota(jnp.int32, (1, T, T), 1)
    col = lax.broadcasted_iota(jnp.int32, (1, T, T), 2)
    wei = jnp.where(col <= row, wei, -jnp.inf)

    # ---- softmax (numerator only; normalize after P@V) ----------------------
    wei = wei - jnp.max(wei, axis=-1, keepdims=True)
    p = jnp.exp(wei)                                         # (bb, T, T), in (0, 1]
    denom = jnp.sum(p, axis=-1, keepdims=True)               # (bb, T, 1)

    # TODO(synk): nn.Dropout(0.1) on the attention weights is identity in eval
    # mode; training-mode random dropout is not reproduced here.

    # ---- weighted sum of values, then normalize the (T, H) output ----------
    out = jnp.einsum('bqk,bkh->bqh', p.astype(mm_dtype), v,
                     preferred_element_type=jnp.float32)     # (bb, T, H) f32
    r = pl.reciprocal(denom, approx=True)                    # EUP slot
    r = r * (2.0 - denom * r)                                # one Newton step -> ~f32 exact
    o_ref[...] = (out * r).astype(o_ref.dtype)


def head_forward(x, w_key, w_query, w_value, *, block_b=None):
    """x: (B, T, C); w_*: (C, H) — returns (B, T, H)."""
    B, T, C = x.shape
    H = w_key.shape[1]

    if block_b is None:
        # Small per-batch work: process the whole batch in one grid step to
        # amortize per-step overhead.  Large per-batch work: one batch row per
        # step so the (parallel) grid can shard across TensorCores (v7x).
        block_b = B if (T * C) <= (128 * 1024) else 1
    assert B % block_b == 0, "block_b must divide the batch dimension"

    # Fused projection weights, order [q | k | v].
    w_qkv = jnp.concatenate([w_query, w_key, w_value], axis=1)   # (C, 3H)

    grid = (B // block_b,)
    return pl.pallas_call(
        head_kernel,
        out_shape=jax.ShapeDtypeStruct((B, T, H), x.dtype),
        grid_spec=pltpu.PrefetchScalarGridSpec(
            num_scalar_prefetch=0,
            grid=grid,
            in_specs=[
                pl.BlockSpec((block_b, T, C), lambda b: (b, 0, 0)),
                # Constant index_map: the weight block is revisited (DMA'd once,
                # not re-fetched) across grid steps.
                pl.BlockSpec((C, 3 * H), lambda b: (0, 0)),
            ],
            out_specs=pl.BlockSpec((block_b, T, H), lambda b: (b, 0, 0)),
        ),
        compiler_params=pltpu.CompilerParams(
            dimension_semantics=("parallel",),
            # Headroom for the full module shapes (T=768, C=1536, f32) which
            # exceed the 16 MiB default scoped-VMEM limit on v5e.
            vmem_limit_bytes=96 * 1024 * 1024,
        ),
    )(x, w_qkv)


def reference_head(x, w_key, w_query, w_value):
    """Pure-JAX reference mirroring the PyTorch forward (eval mode)."""
    prec = lax.Precision.HIGHEST
    k = jnp.einsum('btc,ch->bth', x, w_key, precision=prec)
    q = jnp.einsum('btc,ch->bth', x, w_query, precision=prec)
    v = jnp.einsum('btc,ch->bth', x, w_value, precision=prec)
    wei = jnp.einsum('bqh,bkh->bqk', q, k, precision=prec) * (w_key.shape[1] ** -0.5)
    T = x.shape[1]
    tril = jnp.tril(jnp.ones((T, T), dtype=bool))
    wei = jnp.where(tril[None, :, :], wei, -jnp.inf)
    wei = jax.nn.softmax(wei, axis=-1)
    return jnp.einsum('bqk,bkh->bqh', wei, v, precision=prec)


if __name__ == "__main__":
    # Small, lane-friendly shapes consistent with the module
    # (n_embd -> C, head_size -> H, T <= block_size).
    B, T, C, H = 2, 128, 256, 128

    key = jax.random.PRNGKey(0)
    kx, kk, kq, kv = jax.random.split(key, 4)

    x = jax.random.normal(kx, (B, T, C), dtype=jnp.float32)
    # Deterministic parameter init (roughly nn.Linear scale: U(-1/sqrt(C), 1/sqrt(C)))
    bound = 1.0 / (C ** 0.5)
    w_key = jax.random.uniform(kk, (C, H), jnp.float32, -bound, bound)
    w_query = jax.random.uniform(kq, (C, H), jnp.float32, -bound, bound)
    w_value = jax.random.uniform(kv, (C, H), jnp.float32, -bound, bound)

    out = head_forward(x, w_key, w_query, w_value)
    out = jax.block_until_ready(out)

    ref = reference_head(x, w_key, w_query, w_value)
    assert out.shape == (B, T, H)
    max_err = float(jnp.max(jnp.abs(out - ref)))
    assert jnp.allclose(out, ref, atol=1e-4, rtol=1e-4), f"mismatch vs reference: {max_err}"

    print("KERNEL_OK")
</pallas_src>

<mosaic_0001>
module attributes {stable_mosaic.version = 11 : i64} {
  func.func @head_kernel(%arg0: i32, %arg1: memref<2x128x256xf32, #tpu.memory_space<vmem>>, %arg2: memref<256x384xf32, #tpu.memory_space<vmem>>, %arg3: memref<2x128x128xf32, #tpu.memory_space<vmem>>) attributes {dimension_semantics = [#tpu.dimension_semantics<parallel>], iteration_bounds = array<i64: 1>, scalar_prefetch = 0 : i64, scratch_operands = 0 : i64, tpu.core_type = #tpu.core_type<tc>, window_params = [{transform_indices = @transform_0, window_bounds = array<i64: 2, 128, 256>}, {pipeline_mode = #tpu.pipeline_mode<synchronous>, transform_indices = @transform_1, window_bounds = array<i64: 256, 384>}, {transform_indices = @transform_2, window_bounds = array<i64: 2, 128, 128>}]} {
    %c0 = arith.constant 0 : index
    %c0_0 = arith.constant 0 : index
    %c0_1 = arith.constant 0 : index
    %0 = vector.load %arg1[%c0, %c0_0, %c0_1] : memref<2x128x256xf32, #tpu.memory_space<vmem>>, vector<2x128x256xf32>
    %1 = vector.shape_cast %0 : vector<2x128x256xf32> to vector<256x256xf32>
    %c0_2 = arith.constant 0 : index
    %c0_3 = arith.constant 0 : index
    %2 = vector.load %arg2[%c0_2, %c0_3] : memref<256x384xf32, #tpu.memory_space<vmem>>, vector<256x384xf32>
    %cst = arith.constant dense<0.000000e+00> : vector<256x384xf32>
    %3 = tpu.matmul %1, %2, %cst {dimension_numbers = #tpu.dot_dimension_numbers<[1], [0], [0], [1], [0, 0, 1, 1], [], []>} : vector<256x256xf32>, vector<256x384xf32>, vector<256x384xf32> -> vector<256x384xf32>
    %4 = vector.shape_cast %3 : vector<256x384xf32> to vector<2x128x384xf32>
    %cst_4 = arith.constant 1.280000e+02 : f32
    %cst_5 = arith.constant -5.000000e-01 : f32
    %5 = math.powf %cst_4, %cst_5 : f32
    %6 = vector.extract_strided_slice %4 {offsets = [0, 0, 0], sizes = [2, 128, 128], strides = [1, 1, 1]} : vector<2x128x384xf32> to vector<2x128x128xf32>
    %7 = vector.broadcast %5 : f32 to vector<2x128x128xf32>
    %8 = arith.mulf %6, %7 : vector<2x128x128xf32>
    %9 = vector.extract_strided_slice %4 {offsets = [0, 0, 128], sizes = [2, 128, 128], strides = [1, 1, 1]} : vector<2x128x384xf32> to vector<2x128x128xf32>
    %10 = vector.extract_strided_slice %4 {offsets = [0, 0, 256], sizes = [2, 128, 128], strides = [1, 1, 1]} : vector<2x128x384xf32> to vector<2x128x128xf32>
    "tpu.trace_start"() <{level = 10 : i32, message = "bqh,bkh->bqk"}> : () -> ()
    %cst_6 = arith.constant dense<0.000000e+00> : vector<2x128x128xf32>
    %11 = tpu.matmul %8, %9, %cst_6 {dimension_numbers = #tpu.dot_dimension_numbers<[2], [2], [1], [1], [0, 0, 0, 1, 1, 1], [0], [0]>} : vector<2x128x128xf32>, vector<2x128x128xf32>, vector<2x128x128xf32> -> vector<2x128x128xf32>
    "tpu.trace_stop"() : () -> ()
    %12 = tpu.iota {dimensions = array<i32: 1>} : vector<1x128x128xi32>
    %13 = tpu.iota {dimensions = array<i32: 2>} : vector<1x128x128xi32>
    %14 = arith.cmpi sle, %13, %12 : vector<1x128x128xi32>
    %cst_7 = arith.constant 0xFF800000 : f32
    %15 = vector.shape_cast %14 : vector<1x128x128xi1> to vector<1x128x128xi1>
    %16 = vector.broadcast %15 : vector<1x128x128xi1> to vector<2x128x128xi1>
    %17 = vector.broadcast %cst_7 : f32 to vector<2x128x128xf32>
    %18 = arith.select %16, %11, %17 : vector<2x128x128xi1>, vector<2x128x128xf32>
    %cst_8 = arith.constant dense<0xFF800000> : vector<2x128xf32>
    %19 = vector.multi_reduction <maximumf>, %18, %cst_8 [2] : vector<2x128x128xf32> to vector<2x128xf32>
    %20 = vector.shape_cast %19 : vector<2x128xf32> to vector<2x128x1xf32>
    %21 = vector.broadcast %20 : vector<2x128x1xf32> to vector<2x128x128xf32>
    %22 = arith.subf %18, %21 : vector<2x128x128xf32>
    %23 = math.exp %22 : vector<2x128x128xf32>
    %cst_9 = arith.constant dense<0.000000e+00> : vector<2x128xf32>
    %24 = vector.multi_reduction <add>, %23, %cst_9 [2] : vector<2x128x128xf32> to vector<2x128xf32>
    %25 = vector.shape_cast %24 : vector<2x128xf32> to vector<2x128x1xf32>
    "tpu.trace_start"() <{level = 10 : i32, message = "bqk,bkh->bqh"}> : () -> ()
    %cst_10 = arith.constant dense<0.000000e+00> : vector<2x128x128xf32>
    %26 = tpu.matmul %23, %10, %cst_10 {dimension_numbers = #tpu.dot_dimension_numbers<[2], [1], [1], [2], [0, 0, 0, 1, 1, 2], [0], [0]>} : vector<2x128x128xf32>, vector<2x128x128xf32>, vector<2x128x128xf32> -> vector<2x128x128xf32>
    "tpu.trace_stop"() : () -> ()
    %27 = tpu.reciprocal %25 {approx = true} : vector<2x128x1xf32> -> vector<2x128x1xf32>
    %28 = arith.mulf %25, %27 : vector<2x128x1xf32>
    %cst_11 = arith.constant 2.000000e+00 : f32
    %29 = vector.broadcast %cst_11 : f32 to vector<2x128x1xf32>
    %30 = arith.subf %29, %28 : vector<2x128x1xf32>
    %31 = arith.mulf %27, %30 : vector<2x128x1xf32>
    %32 = vector.broadcast %31 : vector<2x128x1xf32> to vector<2x128x128xf32>
    %33 = arith.mulf %26, %32 : vector<2x128x128xf32>
    %c0_12 = arith.constant 0 : index
    %c0_13 = arith.constant 0 : index
    %c0_14 = arith.constant 0 : index
    %34 = vector.load %arg3[%c0_12, %c0_13, %c0_14] : memref<2x128x128xf32, #tpu.memory_space<vmem>>, vector<2x128x128xf32>
    tpu.vector_store %arg3[%c0_12, %c0_13, %c0_14], %33 {strides = array<i32>} : memref<2x128x128xf32, #tpu.memory_space<vmem>>, vector<2x128x128xf32>,
    return
  }
  func.func @transform_0(%arg0: i32) -> (i32, i32, i32) {
    %c0_i32 = arith.constant 0 : i32
    %c0_i32_0 = arith.constant 0 : i32
    %c0_i32_1 = arith.constant 0 : i32
    return %arg0, %c0_i32, %c0_i32_0 : i32, i32, i32
  }
  func.func @transform_1(%arg0: i32) -> (i32, i32) {
    %c0_i32 = arith.constant 0 : i32
    %c0_i32_0 = arith.constant 0 : i32
    %c0_i32_1 = arith.constant 0 : i32
    return %c0_i32, %c0_i32_0 : i32, i32
  }
  func.func @transform_2(%arg0: i32) -> (i32, i32, i32) {
    %c0_i32 = arith.constant 0 : i32
    %c0_i32_0 = arith.constant 0 : i32
    %c0_i32_1 = arith.constant 0 : i32
    return %arg0, %c0_i32, %c0_i32_0 : i32, i32, i32
  }
}

</mosaic_0001>

<llo_original>
// kernel: tpu_custom_call.1
$region0: #{tpu_custom_call.1}
  #allocation0 [shape = 'u32[]', space=smem, size = 0x4, offset = 0x4, fixed_abs, tag = 'smem constant byte address 0x4 - core index']
  #allocation1 [shape = 'u32[72,128]{1,0:T(1,128)}', space=vmem, size = 0x9000, scoped, tag = 'internal scratch']
  %s0 = inlined_call_operand.hbm [shape: f32[2,128,256], index: 0, kind: input, shape index: {}]
  %s1 = inlined_call_operand.hbm [shape: f32[256,384], index: 1, kind: input, shape index: {}]
  %s2 = inlined_call_operand.hbm [shape: f32[2,128,128], index: 2, kind: output, shape index: {}]
  %s3 = sld [smem:[#allocation0]]
  $region26: #{tpu_custom_call.1} parent=0
    _
  %s5 = ssub.s32 1, %s3
  %s6 = scalar_select 0, %s5, %s3
  $region1: #{tpu_custom_call.1} parent=0
    #allocation2 [shape = 'u8[262144]{0}', space=vmem, size = 0x40000, scoped, tag = 'input window, operand 0, single buffered']
    #allocation3 [shape = 's32[1]{0}', space=sflag, size = 0x4, scoped, tag = 'scoped memory for tpu_custom_call.1']
    #allocation4 [shape = 's32[1]{0}', space=sflag, size = 0x4, scoped, tag = 'scoped memory for tpu_custom_call.1']
    #allocation5 [shape = 'u8[393216]{0}', space=vmem, size = 0x60000, scoped, tag = 'input window, operand 1, single buffered']
    #allocation6 [shape = 's32[1]{0}', space=sflag, size = 0x4, scoped, tag = 'scoped memory for tpu_custom_call.1']
    #allocation7 [shape = 'u8[131072]{0}', space=vmem, size = 0x20000, scoped, tag = 'output window, operand 0, single buffered']
    %7 = vsyncpa [#allocation3], 0
    %8 = vsyncpa [#allocation6], 0
    %9 = vsyncpa [#allocation4], 0
    // Predicated region
    $region2: #{tpu_custom_call.1} parent=1 // pred_check
      _
    $region3: #{tpu_custom_call.1} parent=1 // pred_check_branch
      %11 = sbr.rel (0) target = $region5
    $region4: #{tpu_custom_call.1} parent=1 // pred_region
      %13 = vsyncadd [#allocation3], 0
      %s14 = sshll.u32 %s0, 4
      %s15 = int_to_ptr.hbm [resolvable:$true] %s14
      %s16 = sshll.u32 [#allocation2], 4
      %s17 = int_to_ptr.vmem [resolvable:$true] %s16
      %22 = dma.hbm_to_vmem [thread:$0]  %s15, 8192, %s17, [#allocation3], 256, 256, 16
    $region5: #{tpu_custom_call.1} parent=1 // pred_fallthru
      _
    // Predicated region
    $region6: #{tpu_custom_call.1} parent=1 // pred_check
      _
    $region7: #{tpu_custom_call.1} parent=1 // pred_check_branch
      %24 = sbr.rel (0) target = $region9
    $region8: #{tpu_custom_call.1} parent=1 // pred_region
      %26 = vsyncadd [#allocation6], 0
      %s27 = sshll.u32 %s1, 4
      %s28 = int_to_ptr.hbm [resolvable:$true] %s27
      %s29 = sshll.u32 [#allocation5], 4
      %s30 = int_to_ptr.vmem [resolvable:$true] %s29
      %35 = dma.hbm_to_vmem [thread:$0]  %s28, 12288, %s30, [#allocation6], 384, 384, 24
    $region9: #{tpu_custom_call.1} parent=1 // pred_fallthru
      _
    // Predicated region
    $region10: #{tpu_custom_call.1} parent=1 // pred_check
      _
    $region11: #{tpu_custom_call.1} parent=1 // pred_check_branch
      %37 = sbr.rel (0) target = $region13
    $region12: #{tpu_custom_call.1} parent=1 // pred_region
      %39 = dma.done [#allocation3], 8192
    $region13: #{tpu_custom_call.1} parent=1 // pred_fallthru
      _
    // Predicated region
    $region14: #{tpu_custom_call.1} parent=1 // pred_check
      _
    $region15: #{tpu_custom_call.1} parent=1 // pred_check_branch
      %41 = sbr.rel (0) target = $region17
    $region16: #{tpu_custom_call.1} parent=1 // pred_region
      %43 = dma.done [#allocation6], 12288
    $region17: #{tpu_custom_call.1} parent=1 // pred_fallthru
      _
    %v44 = vld [vmem:[#allocation2] sm:$0xff]
    %v45 = vld [vmem:[#allocation2 + $0x8] sm:$0xff]
    %v46 = vld [vmem:[#allocation2 + $0x10] sm:$0xff]
    %v47 = vld [vmem:[#allocation2 + $0x18] sm:$0xff]
    %v48 = vld [vmem:[#allocation2 + $0x20] sm:$0xff]
    %v49 = vld [vmem:[#allocation2 + $0x28] sm:$0xff]
    %v50 = vld [vmem:[#allocation2 + $0x30] sm:$0xff]
    %v51 = vld [vmem:[#allocation2 + $0x38] sm:$0xff]
    %v52 = vld [vmem:[#allocation2 + $0x40] sm:$0xff]
    %v53 = vld [vmem:[#allocation2 + $0x48] sm:$0xff]
    %v54 = vld [vmem:[#allocation2 + $0x50] sm:$0xff]
    %v55 = vld [vmem:[#allocation2 + $0x58] sm:$0xff]
    %v56 = vld [vmem:[#allocation2 + $0x60] sm:$0xff]
    %v57 = vld [vmem:[#allocation2 + $0x68] sm:$0xff]
    %v58 = vld [vmem:[#allocation2 + $0x70] sm:$0xff]
    %v59 = vld [vmem:[#allocation2 + $0x78] sm:$0xff]
    %v60 = vld [vmem:[#allocation2 + $0x80] sm:$0xff]
    %v61 = vld [vmem:[#allocation2 + $0x88] sm:$0xff]
    %v62 = vld [vmem:[#allocation2 + $0x90] sm:$0xff]
    %v63 = vld [vmem:[#allocation2 + $0x98] sm:$0xff]
    %v64 = vld [vmem:[#allocation2 + $0xa0] sm:$0xff]
    %v65 = vld [vmem:[#allocation2 + $0xa8] sm:$0xff]
    %v66 = vld [vmem:[#allocation2 + $0xb0] sm:$0xff]
    %v67 = vld [vmem:[#allocation2 + $0xb8] sm:$0xff]
    %v68 = vld [vmem:[#allocation2 + $0xc0] sm:$0xff]
    %v69 = vld [vmem:[#allocation2 + $0xc8] sm:$0xff]
    %v70 = vld [vmem:[#allocation2 + $0xd0] sm:$0xff]
    %v71 = vld [vmem:[#allocation2 + $0xd8] sm:$0xff]
    %v72 = vld [vmem:[#allocation2 + $0xe0] sm:$0xff]
    %v73 = vld [vmem:[#allocation2 + $0xe8] sm:$0xff]
    %v74 = vld [vmem:[#allocation2 + $0xf0] sm:$0xff]
    %v75 = vld [vmem:[#allocation2 + $0xf8] sm:$0xff]
    %v76 = vld [vmem:[#allocation2 + $0x100] sm:$0xff]
    %v77 = vld [vmem:[#allocation2 + $0x108] sm:$0xff]
    %v78 = vld [vmem:[#allocation2 + $0x110] sm:$0xff]
    %v79 = vld [vmem:[#allocation2 + $0x118] sm:$0xff]
    %v80 = vld [vmem:[#allocation2 + $0x120] sm:$0xff]
    %v81 = vld [vmem:[#allocation2 + $0x128] sm:$0xff]
    %v82 = vld [vmem:[#allocation2 + $0x130] sm:$0xff]
    %v83 = vld [vmem:[#allocation2 + $0x138] sm:$0xff]
    %v84 = vld [vmem:[#allocation2 + $0x140] sm:$0xff]
    %v85 = vld [vmem:[#allocation2 + $0x148] sm:$0xff]
    %v86 = vld [vmem:[#allocation2 + $0x150] sm:$0xff]
    %v87 = vld [vmem:[#allocation2 + $0x158] sm:$0xff]
    %v88 = vld [vmem:[#allocation2 + $0x160] sm:$0xff]
    %v89 = vld [vmem:[#allocation2 + $0x168] sm:$0xff]
    %v90 = vld [vmem:[#allocation2 + $0x170] sm:$0xff]
    %v91 = vld [vmem:[#allocation2 + $0x178] sm:$0xff]
    %v92 = vld [vmem:[#allocation2 + $0x180] sm:$0xff]
    %v93 = vld [vmem:[#allocation2 + $0x188] sm:$0xff]
    %v94 = vld [vmem:[#allocation2 + $0x190] sm:$0xff]
    %v95 = vld [vmem:[#allocation2 + $0x198] sm:$0xff]
    %v96 = vld [vmem:[#allocation2 + $0x1a0] sm:$0xff]
    %v97 = vld [vmem:[#allocation2 + $0x1a8] sm:$0xff]
    %v98 = vld [vmem:[#allocation2 + $0x1b0] sm:$0xff]
    %v99 = vld [vmem:[#allocation2 + $0x1b8] sm:$0xff]
    %v100 = vld [vmem:[#allocation2 + $0x1c0] sm:$0xff]
    %v101 = vld [vmem:[#allocation2 + $0x1c8] sm:$0xff]
    %v102 = vld [vmem:[#allocation2 + $0x1d0] sm:$0xff]
    %v103 = vld [vmem:[#allocation2 + $0x1d8] sm:$0xff]
    %v104 = vld [vmem:[#allocation2 + $0x1e0] sm:$0xff]
    %v105 = vld [vmem:[#allocation2 + $0x1e8] sm:$0xff]
    %v106 = vld [vmem:[#allocation2 + $0x1f0] sm:$0xff]
    %v107 = vld [vmem:[#allocation2 + $0x1f8] sm:$0xff]
    %v108 = vld [vmem:[#allocation5] sm:$0xff]
    %v109 = vld [vmem:[#allocation5 + $0x8] sm:$0xff]
    %v110 = vld [vmem:[#allocation5 + $0x10] sm:$0xff]
    %v111 = vld [vmem:[#allocation5 + $0x18] sm:$0xff]
    %v112 = vld [vmem:[#allocation5 + $0x20] sm:$0xff]
    %v113 = vld [vmem:[#allocation5 + $0x28] sm:$0xff]
    %v114 = vld [vmem:[#allocation5 + $0x30] sm:$0xff]
    %v115 = vld [vmem:[#allocation5 + $0x38] sm:$0xff]
    %v116 = vld [vmem:[#allocation5 + $0x40] sm:$0xff]
    %v117 = vld [vmem:[#allocation5 + $0x48] sm:$0xff]
    %v118 = vld [vmem:[#allocation5 + $0x50] sm:$0xff]
    %v119 = vld [vmem:[#allocation5 + $0x58] sm:$0xff]
    %v120 = vld [vmem:[#allocation5 + $0x60] sm:$0xff]
    %v121 = vld [vmem:[#allocation5 + $0x68] sm:$0xff]
    %v122 = vld [vmem:[#allocation5 + $0x70] sm:$0xff]
    %v123 = vld [vmem:[#allocation5 + $0x78] sm:$0xff]
    %v124 = vld [vmem:[#allocation5 + $0x80] sm:$0xff]
    %v125 = vld [vmem:[#allocation5 + $0x88] sm:$0xff]
    %v126 = vld [vmem:[#allocation5 + $0x90] sm:$0xff]
    %v127 = vld [vmem:[#allocation5 + $0x98] sm:$0xff]
    %v128 = vld [vmem:[#allocation5 + $0xa0] sm:$0xff]
    %v129 = vld [vmem:[#allocation5 + $0xa8] sm:$0xff]
    %v130 = vld [vmem:[#allocation5 + $0xb0] sm:$0xff]
    %v131 = vld [vmem:[#allocation5 + $0xb8] sm:$0xff]
    %v132 = vld [vmem:[#allocation5 + $0xc0] sm:$0xff]
    %v133 = vld [vmem:[#allocation5 + $0xc8] sm:$0xff]
    %v134 = vld [vmem:[#allocation5 + $0xd0] sm:$0xff]
    %v135 = vld [vmem:[#allocation5 + $0xd8] sm:$0xff]
    %v136 = vld [vmem:[#allocation5 + $0xe0] sm:$0xff]
    %v137 = vld [vmem:[#allocation5 + $0xe8] sm:$0xff]
    %v138 = vld [vmem:[#allocation5 + $0xf0] sm:$0xff]
    %v139 = vld [vmem:[#allocation5 + $0xf8] sm:$0xff]
    %v140 = vld [vmem:[#allocation5 + $0x100] sm:$0xff]
    %v141 = vld [vmem:[#allocation5 + $0x108] sm:$0xff]
    %v142 = vld [vmem:[#allocation5 + $0x110] sm:$0xff]
    %v143 = vld [vmem:[#allocation5 + $0x118] sm:$0xff]
    %v144 = vld [vmem:[#allocation5 + $0x120] sm:$0xff]
    %v145 = vld [vmem:[#allocation5 + $0x128] sm:$0xff]
    %v146 = vld [vmem:[#allocation5 + $0x130] sm:$0xff]
    %v147 = vld [vmem:[#allocation5 + $0x138] sm:$0xff]
    %v148 = vld [vmem:[#allocation5 + $0x140] sm:$0xff]
    %v149 = vld [vmem:[#allocation5 + $0x148] sm:$0xff]
    %v150 = vld [vmem:[#allocation5 + $0x150] sm:$0xff]
    %v151 = vld [vmem:[#allocation5 + $0x158] sm:$0xff]
    %v152 = vld [vmem:[#allocation5 + $0x160] sm:$0xff]
    %v153 = vld [vmem:[#allocation5 + $0x168] sm:$0xff]
    %v154 = vld [vmem:[#allocation5 + $0x170] sm:$0xff]
    %v155 = vld [vmem:[#allocation5 + $0x178] sm:$0xff]
    %v156 = vld [vmem:[#allocation5 + $0x180] sm:$0xff]
    %v157 = vld [vmem:[#allocation5 + $0x188] sm:$0xff]
    %v158 = vld [vmem:[#allocation5 + $0x190] sm:$0xff]
    %v159 = vld [vmem:[#allocation5 + $0x198] sm:$0xff]
    %v160 = vld [vmem:[#allocation5 + $0x1a0] sm:$0xff]
    %v161 = vld [vmem:[#allocation5 + $0x1a8] sm:$0xff]
    %v162 = vld [vmem:[#allocation5 + $0x1b0] sm:$0xff]
    %v163 = vld [vmem:[#allocation5 + $0x1b8] sm:$0xff]
    %v164 = vld [vmem:[#allocation5 + $0x1c0] sm:$0xff]
    %v165 = vld [vmem:[#allocation5 + $0x1c8] sm:$0xff]
    %v166 = vld [vmem:[#allocation5 + $0x1d0] sm:$0xff]
    %v167 = vld [vmem:[#allocation5 + $0x1d8] sm:$0xff]
    %v168 = vld [vmem:[#allocation5 + $0x1e0] sm:$0xff]
    %v169 = vld [vmem:[#allocation5 + $0x1e8] sm:$0xff]
    %v170 = vld [vmem:[#allocation5 + $0x1f0] sm:$0xff]
    %v171 = vld [vmem:[#allocation5 + $0x1f8] sm:$0xff]
    %v172 = vld [vmem:[#allocation5 + $0x200] sm:$0xff]
    %v173 = vld [vmem:[#allocation5 + $0x208] sm:$0xff]
    %v174 = vld [vmem:[#allocation5 + $0x210] sm:$0xff]
    %v175 = vld [vmem:[#allocation5 + $0x218] sm:$0xff]
    %v176 = vld [vmem:[#allocation5 + $0x220] sm:$0xff]
    %v177 = vld [vmem:[#allocation5 + $0x228] sm:$0xff]
    %v178 = vld [vmem:[#allocation5 + $0x230] sm:$0xff]
    %v179 = vld [vmem:[#allocation5 + $0x238] sm:$0xff]
    %v180 = vld [vmem:[#allocation5 + $0x240] sm:$0xff]
    %v181 = vld [vmem:[#allocation5 + $0x248] sm:$0xff]
    %v182 = vld [vmem:[#allocation5 + $0x250] sm:$0xff]
    %v183 = vld [vmem:[#allocation5 + $0x258] sm:$0xff]
    %v184 = vld [vmem:[#allocation5 + $0x260] sm:$0xff]
    %v185 = vld [vmem:[#allocation5 + $0x268] sm:$0xff]
    %v186 = vld [vmem:[#allocation5 + $0x270] sm:$0xff]
    %v187 = vld [vmem:[#allocation5 + $0x278] sm:$0xff]
    %v188 = vld [vmem:[#allocation5 + $0x280] sm:$0xff]
    %v189 = vld [vmem:[#allocation5 + $0x288] sm:$0xff]
    %v190 = vld [vmem:[#allocation5 + $0x290] sm:$0xff]
    %v191 = vld [vmem:[#allocation5 + $0x298] sm:$0xff]
    %v192 = vld [vmem:[#allocation5 + $0x2a0] sm:$0xff]
    %v193 = vld [vmem:[#allocation5 + $0x2a8] sm:$0xff]
    %v194 = vld [vmem:[#allocation5 + $0x2b0] sm:$0xff]
    %v195 = vld [vmem:[#allocation5 + $0x2b8] sm:$0xff]
    %v196 = vld [vmem:[#allocation5 + $0x2c0] sm:$0xff]
    %v197 = vld [vmem:[#allocation5 + $0x2c8] sm:$0xff]
    %v198 = vld [vmem:[#allocation5 + $0x2d0] sm:$0xff]
    %v199 = vld [vmem:[#allocation5 + $0x2d8] sm:$0xff]
    %v200 = vld [vmem:[#allocation5 + $0x2e0] sm:$0xff]
    %v201 = vld [vmem:[#allocation5 + $0x2e8] sm:$0xff]
    %v202 = vld [vmem:[#allocation5 + $0x2f0] sm:$0xff]
    %v203 = vld [vmem:[#allocation5 + $0x2f8] sm:$0xff]
    %204 = vmatpush.msra.mxu0 %v153
    %205 = vmatpush.msra.mxu0 %v150
    %206 = vmatpush.msra.mxu0 %v147
    %207 = vmatpush.msra.mxu0 %v144
    %208 = vmatpush.msra.mxu0 %v141
    %209 = vmatpush.msra.mxu0 %v138
    %210 = vmatpush.msra.mxu0 %v135
    %211 = vmatpush.msra.mxu0 %v132
    %212 = vmatpush.msra.mxu0 %v129
    %213 = vmatpush.msra.mxu0 %v126
    %214 = vmatpush.msra.mxu0 %v123
    %215 = vmatpush.msra.mxu0 %v120
    %216 = vmatpush.msra.mxu0 %v117
    %217 = vmatpush.msra.mxu0 %v114
    %218 = vmatpush.msra.mxu0 %v111
    %219 = vmatpush.msra.mxu0 %v108
    %220 = vmatmul.f32.gmra.mxu0 %v44
    %v221 = vpop.f32.mrf.mxu0
    %v222 = vadd.f32 0.0, %v221
    %223 = vmatmul.f32.gmra.mxu0 %v46
    %v224 = vpop.f32.mrf.mxu0
    %v225 = vadd.f32 0.0, %v224
    %226 = vmatmul.f32.gmra.mxu0 %v48
    %v227 = vpop.f32.mrf.mxu0
    %v228 = vadd.f32 0.0, %v227
    %229 = vmatmul.f32.gmra.mxu0 %v50
    %v230 = vpop.f32.mrf.mxu0
    %v231 = vadd.f32 0.0, %v230
    %232 = vmatmul.f32.gmra.mxu0 %v52
    %v233 = vpop.f32.mrf.mxu0
    %v234 = vadd.f32 0.0, %v233
    %235 = vmatmul.f32.gmra.mxu0 %v54
    %v236 = vpop.f32.mrf.mxu0
    %v237 = vadd.f32 0.0, %v236
    %238 = vmatmul.f32.gmra.mxu0 %v56
    %v239 = vpop.f32.mrf.mxu0
    %v240 = vadd.f32 0.0, %v239
    %241 = vmatmul.f32.gmra.mxu0 %v58
    %v242 = vpop.f32.mrf.mxu0
    %v243 = vadd.f32 0.0, %v242
    %244 = vmatmul.f32.gmra.mxu0 %v60
    %v245 = vpop.f32.mrf.mxu0
    %v246 = vadd.f32 0.0, %v245
    %247 = vmatmul.f32.gmra.mxu0 %v62
    %v248 = vpop.f32.mrf.mxu0
    %v249 = vadd.f32 0.0, %v248
    %250 = vmatmul.f32.gmra.mxu0 %v64
    %v251 = vpop.f32.mrf.mxu0
    %v252 = vadd.f32 0.0, %v251
    %253 = vmatmul.f32.gmra.mxu0 %v66
    %v254 = vpop.f32.mrf.mxu0
    %v255 = vadd.f32 0.0, %v254
    %256 = vmatmul.f32.gmra.mxu0 %v68
    %v257 = vpop.f32.mrf.mxu0
    %v258 = vadd.f32 0.0, %v257
    %259 = vmatmul.f32.gmra.mxu0 %v70
    %v260 = vpop.f32.mrf.mxu0
    %v261 = vadd.f32 0.0, %v260
    %262 = vmatmul.f32.gmra.mxu0 %v72
    %v263 = vpop.f32.mrf.mxu0
    %v264 = vadd.f32 0.0, %v263
    %265 = vmatmul.f32.gmra.mxu0 %v74
    %v266 = vpop.f32.mrf.mxu0
    %v267 = vadd.f32 0.0, %v266
    %268 = vmatmul.f32.gmra.mxu0 %v76
    %v269 = vpop.f32.mrf.mxu0
    %v270 = vadd.f32 0.0, %v269
    %271 = vmatmul.f32.gmra.mxu0 %v78
    %v272 = vpop.f32.mrf.mxu0
    %v273 = vadd.f32 0.0, %v272
    %274 = vmatmul.f32.gmra.mxu0 %v80
    %v275 = vpop.f32.mrf.mxu0
    %v276 = vadd.f32 0.0, %v275
    %277 = vmatmul.f32.gmra.mxu0 %v82
    %v278 = vpop.f32.mrf.mxu0
    %v279 = vadd.f32 0.0, %v278
    %280 = vmatmul.f32.gmra.mxu0 %v84
    %v281 = vpop.f32.mrf.mxu0
    %v282 = vadd.f32 0.0, %v281
    %283 = vmatmul.f32.gmra.mxu0 %v86
    %v284 = vpop.f32.mrf.mxu0
    %v285 = vadd.f32 0.0, %v284
    %286 = vmatmul.f32.gmra.mxu0 %v88
    %v287 = vpop.f32.mrf.mxu0
    %v288 = vadd.f32 0.0, %v287
    %289 = vmatmul.f32.gmra.mxu0 %v90
    %v290 = vpop.f32.mrf.mxu0
    %v291 = vadd.f32 0.0, %v290
    %292 = vmatmul.f32.gmra.mxu0 %v92
    %v293 = vpop.f32.mrf.mxu0
    %v294 = vadd.f32 0.0, %v293
    %295 = vmatmul.f32.gmra.mxu0 %v94
    %v296 = vpop.f32.mrf.mxu0
    %v297 = vadd.f32 0.0, %v296
    %298 = vmatmul.f32.gmra.mxu0 %v96
    %v299 = vpop.f32.mrf.mxu0
    %v300 = vadd.f32 0.0, %v299
    %301 = vmatmul.f32.gmra.mxu0 %v98
    %v302 = vpop.f32.mrf.mxu0
    %v303 = vadd.f32 0.0, %v302
    %304 = vmatmul.f32.gmra.mxu0 %v100
    %v305 = vpop.f32.mrf.mxu0
    %v306 = vadd.f32 0.0, %v305
    %307 = vmatmul.f32.gmra.mxu0 %v102
    %v308 = vpop.f32.mrf.mxu0
    %v309 = vadd.f32 0.0, %v308
    %310 = vmatmul.f32.gmra.mxu0 %v104
    %v311 = vpop.f32.mrf.mxu0
    %v312 = vadd.f32 0.0, %v311
    %313 = vmatmul.f32.gmra.mxu0 %v106
    %v314 = vpop.f32.mrf.mxu0
    %v315 = vadd.f32 0.0, %v314
    %316 = vdwg.mxu0
    %317 = vmatpush.msra.mxu0 %v201
    %318 = vmatpush.msra.mxu0 %v198
    %319 = vmatpush.msra.mxu0 %v195
    %320 = vmatpush.msra.mxu0 %v192
    %321 = vmatpush.msra.mxu0 %v189
    %322 = vmatpush.msra.mxu0 %v186
    %323 = vmatpush.msra.mxu0 %v183
    %324 = vmatpush.msra.mxu0 %v180
    %325 = vmatpush.msra.mxu0 %v177
    %326 = vmatpush.msra.mxu0 %v174
    %327 = vmatpush.msra.mxu0 %v171
    %328 = vmatpush.msra.mxu0 %v168
    %329 = vmatpush.msra.mxu0 %v165
    %330 = vmatpush.msra.mxu0 %v162
    %331 = vmatpush.msra.mxu0 %v159
    %332 = vmatpush.msra.mxu0 %v156
    %333 = vmatmul.f32.gmra.mxu0 %v45
    %v334 = vpop.f32.mrf.mxu0
    %v335 = vadd.f32 %v222, %v334
    %336 = vmatmul.f32.gmra.mxu0 %v47
    %v337 = vpop.f32.mrf.mxu0
    %v338 = vadd.f32 %v225, %v337
    %339 = vmatmul.f32.gmra.mxu0 %v49
    %v340 = vpop.f32.mrf.mxu0
    %v341 = vadd.f32 %v228, %v340
    %342 = vmatmul.f32.gmra.mxu0 %v51
    %v343 = vpop.f32.mrf.mxu0
    %v344 = vadd.f32 %v231, %v343
    %345 = vmatmul.f32.gmra.mxu0 %v53
    %v346 = vpop.f32.mrf.mxu0
    %v347 = vadd.f32 %v234, %v346
    %348 = vmatmul.f32.gmra.mxu0 %v55
    %v349 = vpop.f32.mrf.mxu0
    %v350 = vadd.f32 %v237, %v349
    %351 = vmatmul.f32.gmra.mxu0 %v57
    %v352 = vpop.f32.mrf.mxu0
    %v353 = vadd.f32 %v240, %v352
    %354 = vmatmul.f32.gmra.mxu0 %v59
    %v355 = vpop.f32.mrf.mxu0
    %v356 = vadd.f32 %v243, %v355
    %357 = vmatmul.f32.gmra.mxu0 %v61
    %v358 = vpop.f32.mrf.mxu0
    %v359 = vadd.f32 %v246, %v358
    %360 = vmatmul.f32.gmra.mxu0 %v63
    %v361 = vpop.f32.mrf.mxu0
    %v362 = vadd.f32 %v249, %v361
    %363 = vmatmul.f32.gmra.mxu0 %v65
    %v364 = vpop.f32.mrf.mxu0
    %v365 = vadd.f32 %v252, %v364
    %366 = vmatmul.f32.gmra.mxu0 %v67
    %v367 = vpop.f32.mrf.mxu0
    %v368 = vadd.f32 %v255, %v367
    %369 = vmatmul.f32.gmra.mxu0 %v69
    %v370 = vpop.f32.mrf.mxu0
    %v371 = vadd.f32 %v258, %v370
    %372 = vmatmul.f32.gmra.mxu0 %v71
    %v373 = vpop.f32.mrf.mxu0
    %v374 = vadd.f32 %v261, %v373
    %375 = vmatmul.f32.gmra.mxu0 %v73
    %v376 = vpop.f32.mrf.mxu0
    %v377 = vadd.f32 %v264, %v376
    %378 = vmatmul.f32.gmra.mxu0 %v75
    %v379 = vpop.f32.mrf.mxu0
    %v380 = vadd.f32 %v267, %v379
    %381 = vmatmul.f32.gmra.mxu0 %v77
    %v382 = vpop.f32.mrf.mxu0
    %v383 = vadd.f32 %v270, %v382
    %384 = vmatmul.f32.gmra.mxu0 %v79
    %v385 = vpop.f32.mrf.mxu0
    %v386 = vadd.f32 %v273, %v385
    %387 = vmatmul.f32.gmra.mxu0 %v81
    %v388 = vpop.f32.mrf.mxu0
    %v389 = vadd.f32 %v276, %v388
    %390 = vmatmul.f32.gmra.mxu0 %v83
    %v391 = vpop.f32.mrf.mxu0
    %v392 = vadd.f32 %v279, %v391
    %393 = vmatmul.f32.gmra.mxu0 %v85
    %v394 = vpop.f32.mrf.mxu0
    %v395 = vadd.f32 %v282, %v394
    %396 = vmatmul.f32.gmra.mxu0 %v87
    %v397 = vpop.f32.mrf.mxu0
    %v398 = vadd.f32 %v285, %v397
    %399 = vmatmul.f32.gmra.mxu0 %v89
    %v400 = vpop.f32.mrf.mxu0
    %v401 = vadd.f32 %v288, %v400
    %402 = vmatmul.f32.gmra.mxu0 %v91
    %v403 = vpop.f32.mrf.mxu0
    %v404 = vadd.f32 %v291, %v403
    %405 = vmatmul.f32.gmra.mxu0 %v93
    %v406 = vpop.f32.mrf.mxu0
    %v407 = vadd.f32 %v294, %v406
    %408 = vmatmul.f32.gmra.mxu0 %v95
    %v409 = vpop.f32.mrf.mxu0
    %v410 = vadd.f32 %v297, %v409
    %411 = vmatmul.f32.gmra.mxu0 %v97
    %v412 = vpop.f32.mrf.mxu0
    %v413 = vadd.f32 %v300, %v412
    %414 = vmatmul.f32.gmra.mxu0 %v99
    %v415 = vpop.f32.mrf.mxu0
    %v416 = vadd.f32 %v303, %v415
    %417 = vmatmul.f32.gmra.mxu0 %v101
    %v418 = vpop.f32.mrf.mxu0
    %v419 = vadd.f32 %v306, %v418
    %420 = vmatmul.f32.gmra.mxu0 %v103
    %v421 = vpop.f32.mrf.mxu0
    %v422 = vadd.f32 %v309, %v421
    %423 = vmatmul.f32.gmra.mxu0 %v105
    %v424 = vpop.f32.mrf.mxu0
    %v425 = vadd.f32 %v312, %v424
    %426 = vmatmul.f32.gmra.mxu0 %v107
    %v427 = vpop.f32.mrf.mxu0
    %v428 = vadd.f32 %v315, %v427
    %429 = vdwg.mxu0
    %430 = vmatpush.msra.mxu0 %v154
    %431 = vmatpush.msra.mxu0 %v151
    %432 = vmatpush.msra.mxu0 %v148
    %433 = vmatpush.msra.mxu0 %v145
    %434 = vmatpush.msra.mxu0 %v142
    %435 = vmatpush.msra.mxu0 %v139
    %436 = vmatpush.msra.mxu0 %v136
    %437 = vmatpush.msra.mxu0 %v133
    %438 = vmatpush.msra.mxu0 %v130
    %439 = vmatpush.msra.mxu0 %v127
    %440 = vmatpush.msra.mxu0 %v124
    %441 = vmatpush.msra.mxu0 %v121
    %442 = vmatpush.msra.mxu0 %v118
    %443 = vmatpush.msra.mxu0 %v115
    %444 = vmatpush.msra.mxu0 %v112
    %445 = vmatpush.msra.mxu0 %v109
    %446 = vmatmul.f32.gmra.mxu0 %v44
    %v447 = vpop.f32.mrf.mxu0
    %v448 = vadd.f32 0.0, %v447
    %449 = vmatmul.f32.gmra.mxu0 %v46
    %v450 = vpop.f32.mrf.mxu0
    %v451 = vadd.f32 0.0, %v450
    %452 = vmatmul.f32.gmra.mxu0 %v48
    %v453 = vpop.f32.mrf.mxu0
    %v454 = vadd.f32 0.0, %v453
    %455 = vmatmul.f32.gmra.mxu0 %v50
    %v456 = vpop.f32.mrf.mxu0
    %v457 = vadd.f32 0.0, %v456
    %458 = vmatmul.f32.gmra.mxu0 %v52
    %v459 = vpop.f32.mrf.mxu0
    %v460 = vadd.f32 0.0, %v459
    %461 = vmatmul.f32.gmra.mxu0 %v54
    %v462 = vpop.f32.mrf.mxu0
    %v463 = vadd.f32 0.0, %v462
    %464 = vmatmul.f32.gmra.mxu0 %v56
    %v465 = vpop.f32.mrf.mxu0
    %v466 = vadd.f32 0.0, %v465
    %467 = vmatmul.f32.gmra.mxu0 %v58
    %v468 = vpop.f32.mrf.mxu0
    %v469 = vadd.f32 0.0, %v468
    %470 = vmatmul.f32.gmra.mxu0 %v60
    %v471 = vpop.f32.mrf.mxu0
    %v472 = vadd.f32 0.0, %v471
    %473 = vmatmul.f32.gmra.mxu0 %v62
    %v474 = vpop.f32.mrf.mxu0
    %v475 = vadd.f32 0.0, %v474
    %476 = vmatmul.f32.gmra.mxu0 %v64
    %v477 = vpop.f32.mrf.mxu0
    %v478 = vadd.f32 0.0, %v477
    %479 = vmatmul.f32.gmra.mxu0 %v66
    %v480 = vpop.f32.mrf.mxu0
    %v481 = vadd.f32 0.0, %v480
    %482 = vmatmul.f32.gmra.mxu0 %v68
    %v483 = vpop.f32.mrf.mxu0
    %v484 = vadd.f32 0.0, %v483
    %485 = vmatmul.f32.gmra.mxu0 %v70
    %v486 = vpop.f32.mrf.mxu0
    %v487 = vadd.f32 0.0, %v486
    %488 = vmatmul.f32.gmra.mxu0 %v72
    %v489 = vpop.f32.mrf.mxu0
    %v490 = vadd.f32 0.0, %v489
    %491 = vmatmul.f32.gmra.mxu0 %v74
    %v492 = vpop.f32.mrf.mxu0
    %v493 = vadd.f32 0.0, %v492
    %494 = vmatmul.f32.gmra.mxu0 %v76
    %v495 = vpop.f32.mrf.mxu0
    %v496 = vadd.f32 0.0, %v495
    %497 = vmatmul.f32.gmra.mxu0 %v78
    %v498 = vpop.f32.mrf.mxu0
    %v499 = vadd.f32 0.0, %v498
    %500 = vmatmul.f32.gmra.mxu0 %v80
    %v501 = vpop.f32.mrf.mxu0
    %v502 = vadd.f32 0.0, %v501
    %503 = vmatmul.f32.gmra.mxu0 %v82
    %v504 = vpop.f32.mrf.mxu0
    %v505 = vadd.f32 0.0, %v504
    %506 = vmatmul.f32.gmra.mxu0 %v84
    %v507 = vpop.f32.mrf.mxu0
    %v508 = vadd.f32 0.0, %v507
    %509 = vmatmul.f32.gmra.mxu0 %v86
    %v510 = vpop.f32.mrf.mxu0
    %v511 = vadd.f32 0.0, %v510
    %512 = vmatmul.f32.gmra.mxu0 %v88
    %v513 = vpop.f32.mrf.mxu0
    %v514 = vadd.f32 0.0, %v513
    %515 = vmatmul.f32.gmra.mxu0 %v90
    %v516 = vpop.f32.mrf.mxu0
    %v517 = vadd.f32 0.0, %v516
    %518 = vmatmul.f32.gmra.mxu0 %v92
    %v519 = vpop.f32.mrf.mxu0
    %v520 = vadd.f32 0.0, %v519
    %521 = vmatmul.f32.gmra.mxu0 %v94
    %v522 = vpop.f32.mrf.mxu0
    %v523 = vadd.f32 0.0, %v522
    %524 = vmatmul.f32.gmra.mxu0 %v96
    %v525 = vpop.f32.mrf.mxu0
    %v526 = vadd.f32 0.0, %v525
    %527 = vmatmul.f32.gmra.mxu0 %v98
    %v528 = vpop.f32.mrf.mxu0
    %v529 = vadd.f32 0.0, %v528
    %530 = vmatmul.f32.gmra.mxu0 %v100
    %v531 = vpop.f32.mrf.mxu0
    %v532 = vadd.f32 0.0, %v531
    %533 = vmatmul.f32.gmra.mxu0 %v102
    %v534 = vpop.f32.mrf.mxu0
    %v535 = vadd.f32 0.0, %v534
    %536 = vmatmul.f32.gmra.mxu0 %v104
    %v537 = vpop.f32.mrf.mxu0
    %v538 = vadd.f32 0.0, %v537
    %539 = vmatmul.f32.gmra.mxu0 %v106
    %v540 = vpop.f32.mrf.mxu0
    %v541 = vadd.f32 0.0, %v540
    %542 = vdwg.mxu0
    %543 = vmatpush.msra.mxu0 %v202
    %544 = vmatpush.msra.mxu0 %v199
    %545 = vmatpush.msra.mxu0 %v196
    %546 = vmatpush.msra.mxu0 %v193
    %547 = vmatpush.msra.mxu0 %v190
    %548 = vmatpush.msra.mxu0 %v187
    %549 = vmatpush.msra.mxu0 %v184
    %550 = vmatpush.msra.mxu0 %v181
    %551 = vmatpush.msra.mxu0 %v178
    %552 = vmatpush.msra.mxu0 %v175
    %553 = vmatpush.msra.mxu0 %v172
    %554 = vmatpush.msra.mxu0 %v169
    %555 = vmatpush.msra.mxu0 %v166
    %556 = vmatpush.msra.mxu0 %v163
    %557 = vmatpush.msra.mxu0 %v160
    %558 = vmatpush.msra.mxu0 %v157
    %559 = vmatmul.f32.gmra.mxu0 %v45
    %v560 = vpop.f32.mrf.mxu0
    %v561 = vadd.f32 %v448, %v560
    %562 = vmatmul.f32.gmra.mxu0 %v47
    %v563 = vpop.f32.mrf.mxu0
    %v564 = vadd.f32 %v451, %v563
    %565 = vmatmul.f32.gmra.mxu0 %v49
    %v566 = vpop.f32.mrf.mxu0
    %v567 = vadd.f32 %v454, %v566
    %568 = vmatmul.f32.gmra.mxu0 %v51
    %v569 = vpop.f32.mrf.mxu0
    %v570 = vadd.f32 %v457, %v569
    %571 = vmatmul.f32.gmra.mxu0 %v53
    %v572 = vpop.f32.mrf.mxu0
    %v573 = vadd.f32 %v460, %v572
    %574 = vmatmul.f32.gmra.mxu0 %v55
    %v575 = vpop.f32.mrf.mxu0
    %v576 = vadd.f32 %v463, %v575
    %577 = vmatmul.f32.gmra.mxu0 %v57
    %v578 = vpop.f32.mrf.mxu0
    %v579 = vadd.f32 %v466, %v578
    %580 = vmatmul.f32.gmra.mxu0 %v59
    %v581 = vpop.f32.mrf.mxu0
    %v582 = vadd.f32 %v469, %v581
    %583 = vmatmul.f32.gmra.mxu0 %v61
    %v584 = vpop.f32.mrf.mxu0
    %v585 = vadd.f32 %v472, %v584
    %586 = vmatmul.f32.gmra.mxu0 %v63
    %v587 = vpop.f32.mrf.mxu0
    %v588 = vadd.f32 %v475, %v587
    %589 = vmatmul.f32.gmra.mxu0 %v65
    %v590 = vpop.f32.mrf.mxu0
    %v591 = vadd.f32 %v478, %v590
    %592 = vmatmul.f32.gmra.mxu0 %v67
    %v593 = vpop.f32.mrf.mxu0
    %v594 = vadd.f32 %v481, %v593
    %595 = vmatmul.f32.gmra.mxu0 %v69
    %v596 = vpop.f32.mrf.mxu0
    %v597 = vadd.f32 %v484, %v596
    %598 = vmatmul.f32.gmra.mxu0 %v71
    %v599 = vpop.f32.mrf.mxu0
    %v600 = vadd.f32 %v487, %v599
    %601 = vmatmul.f32.gmra.mxu0 %v73
    %v602 = vpop.f32.mrf.mxu0
    %v603 = vadd.f32 %v490, %v602
    %604 = vmatmul.f32.gmra.mxu0 %v75
    %v605 = vpop.f32.mrf.mxu0
    %v606 = vadd.f32 %v493, %v605
    %607 = vmatmul.f32.gmra.mxu0 %v77
    %v608 = vpop.f32.mrf.mxu0
    %v609 = vadd.f32 %v496, %v608
    %610 = vmatmul.f32.gmra.mxu0 %v79
    %v611 = vpop.f32.mrf.mxu0
    %v612 = vadd.f32 %v499, %v611
    %613 = vmatmul.f32.gmra.mxu0 %v81
    %v614 = vpop.f32.mrf.mxu0
    %v615 = vadd.f32 %v502, %v614
    %616 = vmatmul.f32.gmra.mxu0 %v83
    %v617 = vpop.f32.mrf.mxu0
    %v618 = vadd.f32 %v505, %v617
    %619 = vmatmul.f32.gmra.mxu0 %v85
    %v620 = vpop.f32.mrf.mxu0
    %v621 = vadd.f32 %v508, %v620
    %622 = vmatmul.f32.gmra.mxu0 %v87
    %v623 = vpop.f32.mrf.mxu0
    %v624 = vadd.f32 %v511, %v623
    %625 = vmatmul.f32.gmra.mxu0 %v89
    %v626 = vpop.f32.mrf.mxu0
    %v627 = vadd.f32 %v514, %v626
    %628 = vmatmul.f32.gmra.mxu0 %v91
    %v629 = vpop.f32.mrf.mxu0
    %v630 = vadd.f32 %v517, %v629
    %631 = vmatmul.f32.gmra.mxu0 %v93
    %v632 = vpop.f32.mrf.mxu0
    %v633 = vadd.f32 %v520, %v632
    %634 = vmatmul.f32.gmra.mxu0 %v95
    %v635 = vpop.f32.mrf.mxu0
    %v636 = vadd.f32 %v523, %v635
    %637 = vmatmul.f32.gmra.mxu0 %v97
    %v638 = vpop.f32.mrf.mxu0
    %v639 = vadd.f32 %v526, %v638
    %640 = vmatmul.f32.gmra.mxu0 %v99
    %v641 = vpop.f32.mrf.mxu0
    %v642 = vadd.f32 %v529, %v641
    %643 = vmatmul.f32.gmra.mxu0 %v101
    %v644 = vpop.f32.mrf.mxu0
    %v645 = vadd.f32 %v532, %v644
    %646 = vmatmul.f32.gmra.mxu0 %v103
    %v647 = vpop.f32.mrf.mxu0
    %v648 = vadd.f32 %v535, %v647
    %649 = vmatmul.f32.gmra.mxu0 %v105
    %v650 = vpop.f32.mrf.mxu0
    %v651 = vadd.f32 %v538, %v650
    %652 = vmatmul.f32.gmra.mxu0 %v107
    %v653 = vpop.f32.mrf.mxu0
    %v654 = vadd.f32 %v541, %v653
    %655 = vdwg.mxu0
    %656 = vmatpush.msra.mxu0 %v155
    %657 = vmatpush.msra.mxu0 %v152
    %658 = vmatpush.msra.mxu0 %v149
    %659 = vmatpush.msra.mxu0 %v146
    %660 = vmatpush.msra.mxu0 %v143
    %661 = vmatpush.msra.mxu0 %v140
    %662 = vmatpush.msra.mxu0 %v137
    %663 = vmatpush.msra.mxu0 %v134
    %664 = vmatpush.msra.mxu0 %v131
    %665 = vmatpush.msra.mxu0 %v128
    %666 = vmatpush.msra.mxu0 %v125
    %667 = vmatpush.msra.mxu0 %v122
    %668 = vmatpush.msra.mxu0 %v119
    %669 = vmatpush.msra.mxu0 %v116
    %670 = vmatpush.msra.mxu0 %v113
    %671 = vmatpush.msra.mxu0 %v110
    %672 = vmatmul.f32.gmra.mxu0 %v44
    %v673 = vpop.f32.mrf.mxu0
    %v674 = vadd.f32 0.0, %v673
    %675 = vmatmul.f32.gmra.mxu0 %v46
    %v676 = vpop.f32.mrf.mxu0
    %v677 = vadd.f32 0.0, %v676
    %678 = vmatmul.f32.gmra.mxu0 %v48
    %v679 = vpop.f32.mrf.mxu0
    %v680 = vadd.f32 0.0, %v679
    %681 = vmatmul.f32.gmra.mxu0 %v50
    %v682 = vpop.f32.mrf.mxu0
    %v683 = vadd.f32 0.0, %v682
    %684 = vmatmul.f32.gmra.mxu0 %v52
    %v685 = vpop.f32.mrf.mxu0
    %v686 = vadd.f32 0.0, %v685
    %687 = vmatmul.f32.gmra.mxu0 %v54
    %v688 = vpop.f32.mrf.mxu0
    %v689 = vadd.f32 0.0, %v688
    %690 = vmatmul.f32.gmra.mxu0 %v56
    %v691 = vpop.f32.mrf.mxu0
    %v692 = vadd.f32 0.0, %v691
    %693 = vmatmul.f32.gmra.mxu0 %v58
    %v694 = vpop.f32.mrf.mxu0
    %v695 = vadd.f32 0.0, %v694
    %696 = vmatmul.f32.gmra.mxu0 %v60
    %v697 = vpop.f32.mrf.mxu0
    %v698 = vadd.f32 0.0, %v697
    %699 = vmatmul.f32.gmra.mxu0 %v62
    %v700 = vpop.f32.mrf.mxu0
    %v701 = vadd.f32 0.0, %v700
    %702 = vmatmul.f32.gmra.mxu0 %v64
    %v703 = vpop.f32.mrf.mxu0
    %v704 = vadd.f32 0.0, %v703
    %705 = vmatmul.f32.gmra.mxu0 %v66
    %v706 = vpop.f32.mrf.mxu0
    %v707 = vadd.f32 0.0, %v706
    %708 = vmatmul.f32.gmra.mxu0 %v68
    %v709 = vpop.f32.mrf.mxu0
    %v710 = vadd.f32 0.0, %v709
    %711 = vmatmul.f32.gmra.mxu0 %v70
    %v712 = vpop.f32.mrf.mxu0
    %v713 = vadd.f32 0.0, %v712
    %714 = vmatmul.f32.gmra.mxu0 %v72
    %v715 = vpop.f32.mrf.mxu0
    %v716 = vadd.f32 0.0, %v715
    %717 = vmatmul.f32.gmra.mxu0 %v74
    %v718 = vpop.f32.mrf.mxu0
    %v719 = vadd.f32 0.0, %v718
    %720 = vmatmul.f32.gmra.mxu0 %v76
    %v721 = vpop.f32.mrf.mxu0
    %v722 = vadd.f32 0.0, %v721
    %723 = vmatmul.f32.gmra.mxu0 %v78
    %v724 = vpop.f32.mrf.mxu0
    %v725 = vadd.f32 0.0, %v724
    %726 = vmatmul.f32.gmra.mxu0 %v80
    %v727 = vpop.f32.mrf.mxu0
    %v728 = vadd.f32 0.0, %v727
    %729 = vmatmul.f32.gmra.mxu0 %v82
    %v730 = vpop.f32.mrf.mxu0
    %v731 = vadd.f32 0.0, %v730
    %732 = vmatmul.f32.gmra.mxu0 %v84
    %v733 = vpop.f32.mrf.mxu0
    %v734 = vadd.f32 0.0, %v733
    %735 = vmatmul.f32.gmra.mxu0 %v86
    %v736 = vpop.f32.mrf.mxu0
    %v737 = vadd.f32 0.0, %v736
    %738 = vmatmul.f32.gmra.mxu0 %v88
    %v739 = vpop.f32.mrf.mxu0
    %v740 = vadd.f32 0.0, %v739
    %741 = vmatmul.f32.gmra.mxu0 %v90
    %v742 = vpop.f32.mrf.mxu0
    %v743 = vadd.f32 0.0, %v742
    %744 = vmatmul.f32.gmra.mxu0 %v92
    %v745 = vpop.f32.mrf.mxu0
    %v746 = vadd.f32 0.0, %v745
    %747 = vmatmul.f32.gmra.mxu0 %v94
    %v748 = vpop.f32.mrf.mxu0
    %v749 = vadd.f32 0.0, %v748
    %750 = vmatmul.f32.gmra.mxu0 %v96
    %v751 = vpop.f32.mrf.mxu0
    %v752 = vadd.f32 0.0, %v751
    %753 = vmatmul.f32.gmra.mxu0 %v98
    %v754 = vpop.f32.mrf.mxu0
    %v755 = vadd.f32 0.0, %v754
    %756 = vmatmul.f32.gmra.mxu0 %v100
    %v757 = vpop.f32.mrf.mxu0
    %v758 = vadd.f32 0.0, %v757
    %759 = vmatmul.f32.gmra.mxu0 %v102
    %v760 = vpop.f32.mrf.mxu0
    %v761 = vadd.f32 0.0, %v760
    %762 = vmatmul.f32.gmra.mxu0 %v104
    %v763 = vpop.f32.mrf.mxu0
    %v764 = vadd.f32 0.0, %v763
    %765 = vmatmul.f32.gmra.mxu0 %v106
    %v766 = vpop.f32.mrf.mxu0
    %v767 = vadd.f32 0.0, %v766
    %768 = vdwg.mxu0
    %769 = vmatpush.msra.mxu0 %v203
    %770 = vmatpush.msra.mxu0 %v200
    %771 = vmatpush.msra.mxu0 %v197
    %772 = vmatpush.msra.mxu0 %v194
    %773 = vmatpush.msra.mxu0 %v191
    %774 = vmatpush.msra.mxu0 %v188
    %775 = vmatpush.msra.mxu0 %v185
    %776 = vmatpush.msra.mxu0 %v182
    %777 = vmatpush.msra.mxu0 %v179
    %778 = vmatpush.msra.mxu0 %v176
    %779 = vmatpush.msra.mxu0 %v173
    %780 = vmatpush.msra.mxu0 %v170
    %781 = vmatpush.msra.mxu0 %v167
    %782 = vmatpush.msra.mxu0 %v164
    %783 = vmatpush.msra.mxu0 %v161
    %784 = vmatpush.msra.mxu0 %v158
    %785 = vmatmul.f32.gmra.mxu0 %v45
    %v786 = vpop.f32.mrf.mxu0
    %v787 = vadd.f32 %v674, %v786
    %788 = vmatmul.f32.gmra.mxu0 %v47
    %v789 = vpop.f32.mrf.mxu0
    %v790 = vadd.f32 %v677, %v789
    %791 = vmatmul.f32.gmra.mxu0 %v49
    %v792 = vpop.f32.mrf.mxu0
    %v793 = vadd.f32 %v680, %v792
    %794 = vmatmul.f32.gmra.mxu0 %v51
    %v795 = vpop.f32.mrf.mxu0
    %v796 = vadd.f32 %v683, %v795
    %797 = vmatmul.f32.gmra.mxu0 %v53
    %v798 = vpop.f32.mrf.mxu0
    %v799 = vadd.f32 %v686, %v798
    %800 = vmatmul.f32.gmra.mxu0 %v55
    %v801 = vpop.f32.mrf.mxu0
    %v802 = vadd.f32 %v689, %v801
    %803 = vmatmul.f32.gmra.mxu0 %v57
    %v804 = vpop.f32.mrf.mxu0
    %v805 = vadd.f32 %v692, %v804
    %806 = vmatmul.f32.gmra.mxu0 %v59
    %v807 = vpop.f32.mrf.mxu0
    %v808 = vadd.f32 %v695, %v807
    %809 = vmatmul.f32.gmra.mxu0 %v61
    %v810 = vpop.f32.mrf.mxu0
    %v811 = vadd.f32 %v698, %v810
    %812 = vmatmul.f32.gmra.mxu0 %v63
    %v813 = vpop.f32.mrf.mxu0
    %v814 = vadd.f32 %v701, %v813
    %815 = vmatmul.f32.gmra.mxu0 %v65
    %v816 = vpop.f32.mrf.mxu0
    %v817 = vadd.f32 %v704, %v816
    %818 = vmatmul.f32.gmra.mxu0 %v67
    %v819 = vpop.f32.mrf.mxu0
    %v820 = vadd.f32 %v707, %v819
    %821 = vmatmul.f32.gmra.mxu0 %v69
    %v822 = vpop.f32.mrf.mxu0
    %v823 = vadd.f32 %v710, %v822
    %824 = vmatmul.f32.gmra.mxu0 %v71
    %v825 = vpop.f32.mrf.mxu0
    %v826 = vadd.f32 %v713, %v825
    %827 = vmatmul.f32.gmra.mxu0 %v73
    %v828 = vpop.f32.mrf.mxu0
    %v829 = vadd.f32 %v716, %v828
    %830 = vmatmul.f32.gmra.mxu0 %v75
    %v831 = vpop.f32.mrf.mxu0
    %v832 = vadd.f32 %v719, %v831
    %833 = vmatmul.f32.gmra.mxu0 %v77
    %v834 = vpop.f32.mrf.mxu0
    %v835 = vadd.f32 %v722, %v834
    %836 = vmatmul.f32.gmra.mxu0 %v79
    %v837 = vpop.f32.mrf.mxu0
    %v838 = vadd.f32 %v725, %v837
    %839 = vmatmul.f32.gmra.mxu0 %v81
    %v840 = vpop.f32.mrf.mxu0
    %v841 = vadd.f32 %v728, %v840
    %842 = vmatmul.f32.gmra.mxu0 %v83
    %v843 = vpop.f32.mrf.mxu0
    %v844 = vadd.f32 %v731, %v843
    %845 = vmatmul.f32.gmra.mxu0 %v85
    %v846 = vpop.f32.mrf.mxu0
    %v847 = vadd.f32 %v734, %v846
    %848 = vmatmul.f32.gmra.mxu0 %v87
    %v849 = vpop.f32.mrf.mxu0
    %v850 = vadd.f32 %v737, %v849
    %851 = vmatmul.f32.gmra.mxu0 %v89
    %v852 = vpop.f32.mrf.mxu0
    %v853 = vadd.f32 %v740, %v852
    %854 = vmatmul.f32.gmra.mxu0 %v91
    %v855 = vpop.f32.mrf.mxu0
    %v856 = vadd.f32 %v743, %v855
    %857 = vmatmul.f32.gmra.mxu0 %v93
    %v858 = vpop.f32.mrf.mxu0
    %v859 = vadd.f32 %v746, %v858
    %860 = vmatmul.f32.gmra.mxu0 %v95
    %v861 = vpop.f32.mrf.mxu0
    %v862 = vadd.f32 %v749, %v861
    %863 = vmatmul.f32.gmra.mxu0 %v97
    %v864 = vpop.f32.mrf.mxu0
    %v865 = vadd.f32 %v752, %v864
    %866 = vmatmul.f32.gmra.mxu0 %v99
    %v867 = vpop.f32.mrf.mxu0
    %v868 = vadd.f32 %v755, %v867
    %869 = vmatmul.f32.gmra.mxu0 %v101
    %v870 = vpop.f32.mrf.mxu0
    %v871 = vadd.f32 %v758, %v870
    %872 = vmatmul.f32.gmra.mxu0 %v103
    %v873 = vpop.f32.mrf.mxu0
    %v874 = vadd.f32 %v761, %v873
    %875 = vmatmul.f32.gmra.mxu0 %v105
    %v876 = vpop.f32.mrf.mxu0
    %v877 = vadd.f32 %v764, %v876
    %878 = vmatmul.f32.gmra.mxu0 %v107
    %v879 = vpop.f32.mrf.mxu0
    %v880 = vadd.f32 %v767, %v879
    %881 = vdwg.mxu0
    %v882 = vmul.f32 %v335, 0.088388346
    %v883 = vmul.f32 %v338, 0.088388346
    %v884 = vmul.f32 %v341, 0.088388346
    %v885 = vmul.f32 %v344, 0.088388346
    %v886 = vmul.f32 %v347, 0.088388346
    %v887 = vmul.f32 %v350, 0.088388346
    %v888 = vmul.f32 %v353, 0.088388346
    %v889 = vmul.f32 %v356, 0.088388346
    %v890 = vmul.f32 %v359, 0.088388346
    %v891 = vmul.f32 %v362, 0.088388346
    %v892 = vmul.f32 %v365, 0.088388346
    %v893 = vmul.f32 %v368, 0.088388346
    %v894 = vmul.f32 %v371, 0.088388346
    %v895 = vmul.f32 %v374, 0.088388346
    %v896 = vmul.f32 %v377, 0.088388346
    %v897 = vmul.f32 %v380, 0.088388346
    %v898 = vmul.f32 %v383, 0.088388346
    %v899 = vmul.f32 %v386, 0.088388346
    %v900 = vmul.f32 %v389, 0.088388346
    %v901 = vmul.f32 %v392, 0.088388346
    %v902 = vmul.f32 %v395, 0.088388346
    %v903 = vmul.f32 %v398, 0.088388346
    %v904 = vmul.f32 %v401, 0.088388346
    %v905 = vmul.f32 %v404, 0.088388346
    %v906 = vmul.f32 %v407, 0.088388346
    %v907 = vmul.f32 %v410, 0.088388346
    %v908 = vmul.f32 %v413, 0.088388346
    %v909 = vmul.f32 %v416, 0.088388346
    %v910 = vmul.f32 %v419, 0.088388346
    %v911 = vmul.f32 %v422, 0.088388346
    %v912 = vmul.f32 %v425, 0.088388346
    %v913 = vmul.f32 %v428, 0.088388346
    %914 = vmatpush.xpose.msra.mxu0 %v606
    %915 = vmatpush.xpose.msra.mxu0 %v603
    %916 = vmatpush.xpose.msra.mxu0 %v600
    %917 = vmatpush.xpose.msra.mxu0 %v597
    %918 = vmatpush.xpose.msra.mxu0 %v594
    %919 = vmatpush.xpose.msra.mxu0 %v591
    %920 = vmatpush.xpose.msra.mxu0 %v588
    %921 = vmatpush.xpose.msra.mxu0 %v585
    %922 = vmatpush.xpose.msra.mxu0 %v582
    %923 = vmatpush.xpose.msra.mxu0 %v579
    %924 = vmatpush.xpose.msra.mxu0 %v576
    %925 = vmatpush.xpose.msra.mxu0 %v573
    %926 = vmatpush.xpose.msra.mxu0 %v570
    %927 = vmatpush.xpose.msra.mxu0 %v567
    %928 = vmatpush.xpose.msra.mxu0 %v564
    %929 = vmatpush.xpose.msra.mxu0 %v561
    %930 = vmatmul.f32.gmra.mxu0 %v882
    %v931 = vpop.f32.mrf.mxu0
    %v932 = vadd.f32 0.0, %v931
    %933 = vmatmul.f32.gmra.mxu0 %v883
    %v934 = vpop.f32.mrf.mxu0
    %v935 = vadd.f32 0.0, %v934
    %936 = vmatmul.f32.gmra.mxu0 %v884
    %v937 = vpop.f32.mrf.mxu0
    %v938 = vadd.f32 0.0, %v937
    %939 = vmatmul.f32.gmra.mxu0 %v885
    %v940 = vpop.f32.mrf.mxu0
    %v941 = vadd.f32 0.0, %v940
    %942 = vmatmul.f32.gmra.mxu0 %v886
    %v943 = vpop.f32.mrf.mxu0
    %v944 = vadd.f32 0.0, %v943
    %945 = vmatmul.f32.gmra.mxu0 %v887
    %v946 = vpop.f32.mrf.mxu0
    %v947 = vadd.f32 0.0, %v946
    %948 = vmatmul.f32.gmra.mxu0 %v888
    %v949 = vpop.f32.mrf.mxu0
    %v950 = vadd.f32 0.0, %v949
    %951 = vmatmul.f32.gmra.mxu0 %v889
    %v952 = vpop.f32.mrf.mxu0
    %v953 = vadd.f32 0.0, %v952
    %954 = vmatmul.f32.gmra.mxu0 %v890
    %v955 = vpop.f32.mrf.mxu0
    %v956 = vadd.f32 0.0, %v955
    %957 = vmatmul.f32.gmra.mxu0 %v891
    %v958 = vpop.f32.mrf.mxu0
    %v959 = vadd.f32 0.0, %v958
    %960 = vmatmul.f32.gmra.mxu0 %v892
    %v961 = vpop.f32.mrf.mxu0
    %v962 = vadd.f32 0.0, %v961
    %963 = vmatmul.f32.gmra.mxu0 %v893
    %v964 = vpop.f32.mrf.mxu0
    %v965 = vadd.f32 0.0, %v964
    %966 = vmatmul.f32.gmra.mxu0 %v894
    %v967 = vpop.f32.mrf.mxu0
    %v968 = vadd.f32 0.0, %v967
    %969 = vmatmul.f32.gmra.mxu0 %v895
    %v970 = vpop.f32.mrf.mxu0
    %v971 = vadd.f32 0.0, %v970
    %972 = vmatmul.f32.gmra.mxu0 %v896
    %v973 = vpop.f32.mrf.mxu0
    %v974 = vadd.f32 0.0, %v973
    %975 = vmatmul.f32.gmra.mxu0 %v897
    %v976 = vpop.f32.mrf.mxu0
    %v977 = vadd.f32 0.0, %v976
    %978 = vdwg.mxu0
    %979 = vmatpush.xpose.msra.mxu0 %v654
    %980 = vmatpush.xpose.msra.mxu0 %v651
    %981 = vmatpush.xpose.msra.mxu0 %v648
    %982 = vmatpush.xpose.msra.mxu0 %v645
    %983 = vmatpush.xpose.msra.mxu0 %v642
    %984 = vmatpush.xpose.msra.mxu0 %v639
    %985 = vmatpush.xpose.msra.mxu0 %v636
    %986 = vmatpush.xpose.msra.mxu0 %v633
    %987 = vmatpush.xpose.msra.mxu0 %v630
    %988 = vmatpush.xpose.msra.mxu0 %v627
    %989 = vmatpush.xpose.msra.mxu0 %v624
    %990 = vmatpush.xpose.msra.mxu0 %v621
    %991 = vmatpush.xpose.msra.mxu0 %v618
    %992 = vmatpush.xpose.msra.mxu0 %v615
    %993 = vmatpush.xpose.msra.mxu0 %v612
    %994 = vmatpush.xpose.msra.mxu0 %v609
    %995 = vmatmul.f32.gmra.mxu0 %v898
    %v996 = vpop.f32.mrf.mxu0
    %v997 = vadd.f32 0.0, %v996
    %998 = vmatmul.f32.gmra.mxu0 %v899
    %v999 = vpop.f32.mrf.mxu0
    %v1000 = vadd.f32 0.0, %v999
    %1001 = vmatmul.f32.gmra.mxu0 %v900
    %v1002 = vpop.f32.mrf.mxu0
    %v1003 = vadd.f32 0.0, %v1002
    %1004 = vmatmul.f32.gmra.mxu0 %v901
    %v1005 = vpop.f32.mrf.mxu0
    %v1006 = vadd.f32 0.0, %v1005
    %1007 = vmatmul.f32.gmra.mxu0 %v902
    %v1008 = vpop.f32.mrf.mxu0
    %v1009 = vadd.f32 0.0, %v1008
    %1010 = vmatmul.f32.gmra.mxu0 %v903
    %v1011 = vpop.f32.mrf.mxu0
    %v1012 = vadd.f32 0.0, %v1011
    %1013 = vmatmul.f32.gmra.mxu0 %v904
    %v1014 = vpop.f32.mrf.mxu0
    %v1015 = vadd.f32 0.0, %v1014
    %1016 = vmatmul.f32.gmra.mxu0 %v905
    %v1017 = vpop.f32.mrf.mxu0
    %v1018 = vadd.f32 0.0, %v1017
    %1019 = vmatmul.f32.gmra.mxu0 %v906
    %v1020 = vpop.f32.mrf.mxu0
    %v1021 = vadd.f32 0.0, %v1020
    %1022 = vmatmul.f32.gmra.mxu0 %v907
    %v1023 = vpop.f32.mrf.mxu0
    %v1024 = vadd.f32 0.0, %v1023
    %1025 = vmatmul.f32.gmra.mxu0 %v908
    %v1026 = vpop.f32.mrf.mxu0
    %v1027 = vadd.f32 0.0, %v1026
    %1028 = vmatmul.f32.gmra.mxu0 %v909
    %v1029 = vpop.f32.mrf.mxu0
    %v1030 = vadd.f32 0.0, %v1029
    %1031 = vmatmul.f32.gmra.mxu0 %v910
    %v1032 = vpop.f32.mrf.mxu0
    %v1033 = vadd.f32 0.0, %v1032
    %1034 = vmatmul.f32.gmra.mxu0 %v911
    %v1035 = vpop.f32.mrf.mxu0
    %v1036 = vadd.f32 0.0, %v1035
    %1037 = vmatmul.f32.gmra.mxu0 %v912
    %v1038 = vpop.f32.mrf.mxu0
    %v1039 = vadd.f32 0.0, %v1038
    %1040 = vmatmul.f32.gmra.mxu0 %v913
    %v1041 = vpop.f32.mrf.mxu0
    %v1042 = vadd.f32 0.0, %v1041
    %1043 = vdwg.mxu0
    %v1044 = vlaneseq
    %v1045 = vshrl.u32 %v1044, 7
    %v1046 = vadd.s32 %v1045, 8
    %v1047 = vadd.s32 %v1045, 16
    %v1048 = vadd.s32 %v1045, 24
    %v1049 = vadd.s32 %v1045, 32
    %v1050 = vadd.s32 %v1045, 40
    %v1051 = vadd.s32 %v1045, 48
    %v1052 = vadd.s32 %v1045, 56
    %v1053 = vadd.s32 %v1045, 64
    %v1054 = vadd.s32 %v1045, 72
    %v1055 = vadd.s32 %v1045, 80
    %v1056 = vadd.s32 %v1045, 88
    %v1057 = vadd.s32 %v1045, 96
    %v1058 = vadd.s32 %v1045, 104
    %v1059 = vadd.s32 %v1045, 112
    %v1060 = vadd.s32 %v1045, 120
    %v1061 = vlaneseq
    %v1062 = vand.u32 %v1061, 127
    %vm1063 = vcmp.le.s32.totalorder %v1062, %v1045
    %vm1064 = vcmp.le.s32.totalorder %v1062, %v1046
    %vm1065 = vcmp.le.s32.totalorder %v1062, %v1047
    %vm1066 = vcmp.le.s32.totalorder %v1062, %v1048
    %vm1067 = vcmp.le.s32.totalorder %v1062, %v1049
    %vm1068 = vcmp.le.s32.totalorder %v1062, %v1050
    %vm1069 = vcmp.le.s32.totalorder %v1062, %v1051
    %vm1070 = vcmp.le.s32.totalorder %v1062, %v1052
    %vm1071 = vcmp.le.s32.totalorder %v1062, %v1053
    %vm1072 = vcmp.le.s32.totalorder %v1062, %v1054
    %vm1073 = vcmp.le.s32.totalorder %v1062, %v1055
    %vm1074 = vcmp.le.s32.totalorder %v1062, %v1056
    %vm1075 = vcmp.le.s32.totalorder %v1062, %v1057
    %vm1076 = vcmp.le.s32.totalorder %v1062, %v1058
    %vm1077 = vcmp.le.s32.totalorder %v1062, %v1059
    %vm1078 = vcmp.le.s32.totalorder %v1062, %v1060
    %v1079 = vsel %vm1063, 1, 0
    %v1080 = vsel %vm1064, 1, 0
    %v1081 = vsel %vm1065, 1, 0
    %v1082 = vsel %vm1066, 1, 0
    %v1083 = vsel %vm1067, 1, 0
    %v1084 = vsel %vm1068, 1, 0
    %v1085 = vsel %vm1069, 1, 0
    %v1086 = vsel %vm1070, 1, 0
    %v1087 = vsel %vm1071, 1, 0
    %v1088 = vsel %vm1072, 1, 0
    %v1089 = vsel %vm1073, 1, 0
    %v1090 = vsel %vm1074, 1, 0
    %v1091 = vsel %vm1075, 1, 0
    %v1092 = vsel %vm1076, 1, 0
    %v1093 = vsel %vm1077, 1, 0
    %v1094 = vsel %vm1078, 1, 0
    %vm1095 = vcmp.eq.s32.totalorder %v1079, 1
    %vm1096 = vcmp.eq.s32.totalorder %v1080, 1
    %vm1097 = vcmp.eq.s32.totalorder %v1081, 1
    %vm1098 = vcmp.eq.s32.totalorder %v1082, 1
    %vm1099 = vcmp.eq.s32.totalorder %v1083, 1
    %vm1100 = vcmp.eq.s32.totalorder %v1084, 1
    %vm1101 = vcmp.eq.s32.totalorder %v1085, 1
    %vm1102 = vcmp.eq.s32.totalorder %v1086, 1
    %vm1103 = vcmp.eq.s32.totalorder %v1087, 1
    %vm1104 = vcmp.eq.s32.totalorder %v1088, 1
    %vm1105 = vcmp.eq.s32.totalorder %v1089, 1
    %vm1106 = vcmp.eq.s32.totalorder %v1090, 1
    %vm1107 = vcmp.eq.s32.totalorder %v1091, 1
    %vm1108 = vcmp.eq.s32.totalorder %v1092, 1
    %vm1109 = vcmp.eq.s32.totalorder %v1093, 1
    %vm1110 = vcmp.eq.s32.totalorder %v1094, 1
    %v1111 = vsel %vm1095, %v932, -inf
    %v1112 = vsel %vm1096, %v935, -inf
    %v1113 = vsel %vm1097, %v938, -inf
    %v1114 = vsel %vm1098, %v941, -inf
    %v1115 = vsel %vm1099, %v944, -inf
    %v1116 = vsel %vm1100, %v947, -inf
    %v1117 = vsel %vm1101, %v950, -inf
    %v1118 = vsel %vm1102, %v953, -inf
    %v1119 = vsel %vm1103, %v956, -inf
    %v1120 = vsel %vm1104, %v959, -inf
    %v1121 = vsel %vm1105, %v962, -inf
    %v1122 = vsel %vm1106, %v965, -inf
    %v1123 = vsel %vm1107, %v968, -inf
    %v1124 = vsel %vm1108, %v971, -inf
    %v1125 = vsel %vm1109, %v974, -inf
    %v1126 = vsel %vm1110, %v977, -inf
    %v1127 = vsel %vm1095, %v997, -inf
    %v1128 = vsel %vm1096, %v1000, -inf
    %v1129 = vsel %vm1097, %v1003, -inf
    %v1130 = vsel %vm1098, %v1006, -inf
    %v1131 = vsel %vm1099, %v1009, -inf
    %v1132 = vsel %vm1100, %v1012, -inf
    %v1133 = vsel %vm1101, %v1015, -inf
    %v1134 = vsel %vm1102, %v1018, -inf
    %v1135 = vsel %vm1103, %v1021, -inf
    %v1136 = vsel %vm1104, %v1024, -inf
    %v1137 = vsel %vm1105, %v1027, -inf
    %v1138 = vsel %vm1106, %v1030, -inf
    %v1139 = vsel %vm1107, %v1033, -inf
    %v1140 = vsel %vm1108, %v1036, -inf
    %v1141 = vsel %vm1109, %v1039, -inf
    %v1142 = vsel %vm1110, %v1042, -inf
    %1143 = vmax.xlane.f32.xlu0 %v1111
    %v1144 = vpop.xlane.xlu0 %1143
    %1145 = vmax.xlane.f32.xlu0 %v1112
    %v1146 = vpop.xlane.xlu0 %1145
    %1147 = vmax.xlane.f32.xlu0 %v1113
    %v1148 = vpop.xlane.xlu0 %1147
    %1149 = vmax.xlane.f32.xlu0 %v1114
    %v1150 = vpop.xlane.xlu0 %1149
    %1151 = vmax.xlane.f32.xlu0 %v1115
    %v1152 = vpop.xlane.xlu0 %1151
    %1153 = vmax.xlane.f32.xlu0 %v1116
    %v1154 = vpop.xlane.xlu0 %1153
    %1155 = vmax.xlane.f32.xlu0 %v1117
    %v1156 = vpop.xlane.xlu0 %1155
    %1157 = vmax.xlane.f32.xlu0 %v1118
    %v1158 = vpop.xlane.xlu0 %1157
    %1159 = vmax.xlane.f32.xlu0 %v1119
    %v1160 = vpop.xlane.xlu0 %1159
    %1161 = vmax.xlane.f32.xlu0 %v1120
    %v1162 = vpop.xlane.xlu0 %1161
    %1163 = vmax.xlane.f32.xlu0 %v1121
    %v1164 = vpop.xlane.xlu0 %1163
    %1165 = vmax.xlane.f32.xlu0 %v1122
    %v1166 = vpop.xlane.xlu0 %1165
    %1167 = vmax.xlane.f32.xlu0 %v1123
    %v1168 = vpop.xlane.xlu0 %1167
    %1169 = vmax.xlane.f32.xlu0 %v1124
    %v1170 = vpop.xlane.xlu0 %1169
    %1171 = vmax.xlane.f32.xlu0 %v1125
    %v1172 = vpop.xlane.xlu0 %1171
    %1173 = vmax.xlane.f32.xlu0 %v1126
    %v1174 = vpop.xlane.xlu0 %1173
    %1175 = vmax.xlane.f32.xlu0 %v1127
    %v1176 = vpop.xlane.xlu0 %1175
    %1177 = vmax.xlane.f32.xlu0 %v1128
    %v1178 = vpop.xlane.xlu0 %1177
    %1179 = vmax.xlane.f32.xlu0 %v1129
    %v1180 = vpop.xlane.xlu0 %1179
    %1181 = vmax.xlane.f32.xlu0 %v1130
    %v1182 = vpop.xlane.xlu0 %1181
    %1183 = vmax.xlane.f32.xlu0 %v1131
    %v1184 = vpop.xlane.xlu0 %1183
    %1185 = vmax.xlane.f32.xlu0 %v1132
    %v1186 = vpop.xlane.xlu0 %1185
    %1187 = vmax.xlane.f32.xlu0 %v1133
    %v1188 = vpop.xlane.xlu0 %1187
    %1189 = vmax.xlane.f32.xlu0 %v1134
    %v1190 = vpop.xlane.xlu0 %1189
    %1191 = vmax.xlane.f32.xlu0 %v1135
    %v1192 = vpop.xlane.xlu0 %1191
    %1193 = vmax.xlane.f32.xlu0 %v1136
    %v1194 = vpop.xlane.xlu0 %1193
    %1195 = vmax.xlane.f32.xlu0 %v1137
    %v1196 = vpop.xlane.xlu0 %1195
    %1197 = vmax.xlane.f32.xlu0 %v1138
    %v1198 = vpop.xlane.xlu0 %1197
    %1199 = vmax.xlane.f32.xlu0 %v1139
    %v1200 = vpop.xlane.xlu0 %1199
    %1201 = vmax.xlane.f32.xlu0 %v1140
    %v1202 = vpop.xlane.xlu0 %1201
    %1203 = vmax.xlane.f32.xlu0 %v1141
    %v1204 = vpop.xlane.xlu0 %1203
    %1205 = vmax.xlane.f32.xlu0 %v1142
    %v1206 = vpop.xlane.xlu0 %1205
    %v1207 = vsub.f32 %v1111, %v1144
    %v1208 = vsub.f32 %v1112, %v1146
    %v1209 = vsub.f32 %v1113, %v1148
    %v1210 = vsub.f32 %v1114, %v1150
    %v1211 = vsub.f32 %v1115, %v1152
    %v1212 = vsub.f32 %v1116, %v1154
    %v1213 = vsub.f32 %v1117, %v1156
    %v1214 = vsub.f32 %v1118, %v1158
    %v1215 = vsub.f32 %v1119, %v1160
    %v1216 = vsub.f32 %v1120, %v1162
    %v1217 = vsub.f32 %v1121, %v1164
    %v1218 = vsub.f32 %v1122, %v1166
    %v1219 = vsub.f32 %v1123, %v1168
    %v1220 = vsub.f32 %v1124, %v1170
    %v1221 = vsub.f32 %v1125, %v1172
    %v1222 = vsub.f32 %v1126, %v1174
    %v1223 = vsub.f32 %v1127, %v1176
    %v1224 = vsub.f32 %v1128, %v1178
    %v1225 = vsub.f32 %v1129, %v1180
    %v1226 = vsub.f32 %v1130, %v1182
    %v1227 = vsub.f32 %v1131, %v1184
    %v1228 = vsub.f32 %v1132, %v1186
    %v1229 = vsub.f32 %v1133, %v1188
    %v1230 = vsub.f32 %v1134, %v1190
    %v1231 = vsub.f32 %v1135, %v1192
    %v1232 = vsub.f32 %v1136, %v1194
    %v1233 = vsub.f32 %v1137, %v1196
    %v1234 = vsub.f32 %v1138, %v1198
    %v1235 = vsub.f32 %v1139, %v1200
    %v1236 = vsub.f32 %v1140, %v1202
    %v1237 = vsub.f32 %v1141, %v1204
    %v1238 = vsub.f32 %v1142, %v1206
    %v1239 = vmul.f32 %v1207, 1.442695
    %v1240 = vpow.pop %v1239
    %v1241 = vmul.f32 %v1208, 1.442695
    %v1242 = vpow.pop %v1241
    %v1243 = vmul.f32 %v1209, 1.442695
    %v1244 = vpow.pop %v1243
    %v1245 = vmul.f32 %v1210, 1.442695
    %v1246 = vpow.pop %v1245
    %v1247 = vmul.f32 %v1211, 1.442695
    %v1248 = vpow.pop %v1247
    %v1249 = vmul.f32 %v1212, 1.442695
    %v1250 = vpow.pop %v1249
    %v1251 = vmul.f32 %v1213, 1.442695
    %v1252 = vpow.pop %v1251
    %v1253 = vmul.f32 %v1214, 1.442695
    %v1254 = vpow.pop %v1253
    %v1255 = vmul.f32 %v1215, 1.442695
    %v1256 = vpow.pop %v1255
    %v1257 = vmul.f32 %v1216, 1.442695
    %v1258 = vpow.pop %v1257
    %v1259 = vmul.f32 %v1217, 1.442695
    %v1260 = vpow.pop %v1259
    %v1261 = vmul.f32 %v1218, 1.442695
    %v1262 = vpow.pop %v1261
    %v1263 = vmul.f32 %v1219, 1.442695
    %v1264 = vpow.pop %v1263
    %v1265 = vmul.f32 %v1220, 1.442695
    %v1266 = vpow.pop %v1265
    %v1267 = vmul.f32 %v1221, 1.442695
    %v1268 = vpow.pop %v1267
    %v1269 = vmul.f32 %v1222, 1.442695
    %v1270 = vpow.pop %v1269
    %v1271 = vmul.f32 %v1223, 1.442695
    %v1272 = vpow.pop %v1271
    %v1273 = vmul.f32 %v1224, 1.442695
    %v1274 = vpow.pop %v1273
    %v1275 = vmul.f32 %v1225, 1.442695
    %v1276 = vpow.pop %v1275
    %v1277 = vmul.f32 %v1226, 1.442695
    %v1278 = vpow.pop %v1277
    %v1279 = vmul.f32 %v1227, 1.442695
    %v1280 = vpow.pop %v1279
    %v1281 = vmul.f32 %v1228, 1.442695
    %v1282 = vpow.pop %v1281
    %v1283 = vmul.f32 %v1229, 1.442695
    %v1284 = vpow.pop %v1283
    %v1285 = vmul.f32 %v1230, 1.442695
    %v1286 = vpow.pop %v1285
    %v1287 = vmul.f32 %v1231, 1.442695
    %v1288 = vpow.pop %v1287
    %v1289 = vmul.f32 %v1232, 1.442695
    %v1290 = vpow.pop %v1289
    %v1291 = vmul.f32 %v1233, 1.442695
    %v1292 = vpow.pop %v1291
    %v1293 = vmul.f32 %v1234, 1.442695
    %v1294 = vpow.pop %v1293
    %v1295 = vmul.f32 %v1235, 1.442695
    %v1296 = vpow.pop %v1295
    %v1297 = vmul.f32 %v1236, 1.442695
    %v1298 = vpow.pop %v1297
    %v1299 = vmul.f32 %v1237, 1.442695
    %v1300 = vpow.pop %v1299
    %v1301 = vmul.f32 %v1238, 1.442695
    %v1302 = vpow.pop %v1301
    %1303 = vadd.xlane.f32.xlu0 %v1240
    %v1304 = vpop.xlane.xlu0 %1303
    %1305 = vadd.xlane.f32.xlu0 %v1242
    %v1306 = vpop.xlane.xlu0 %1305
    %1307 = vadd.xlane.f32.xlu0 %v1244
    %v1308 = vpop.xlane.xlu0 %1307
    %1309 = vadd.xlane.f32.xlu0 %v1246
    %v1310 = vpop.xlane.xlu0 %1309
    %1311 = vadd.xlane.f32.xlu0 %v1248
    %v1312 = vpop.xlane.xlu0 %1311
    %1313 = vadd.xlane.f32.xlu0 %v1250
    %v1314 = vpop.xlane.xlu0 %1313
    %1315 = vadd.xlane.f32.xlu0 %v1252
    %v1316 = vpop.xlane.xlu0 %1315
    %1317 = vadd.xlane.f32.xlu0 %v1254
    %v1318 = vpop.xlane.xlu0 %1317
    %1319 = vadd.xlane.f32.xlu0 %v1256
    %v1320 = vpop.xlane.xlu0 %1319
    %1321 = vadd.xlane.f32.xlu0 %v1258
    %v1322 = vpop.xlane.xlu0 %1321
    %1323 = vadd.xlane.f32.xlu0 %v1260
    %v1324 = vpop.xlane.xlu0 %1323
    %1325 = vadd.xlane.f32.xlu0 %v1262
    %v1326 = vpop.xlane.xlu0 %1325
    %1327 = vadd.xlane.f32.xlu0 %v1264
    %v1328 = vpop.xlane.xlu0 %1327
    %1329 = vadd.xlane.f32.xlu0 %v1266
    %v1330 = vpop.xlane.xlu0 %1329
    %1331 = vadd.xlane.f32.xlu0 %v1268
    %v1332 = vpop.xlane.xlu0 %1331
    %1333 = vadd.xlane.f32.xlu0 %v1270
    %v1334 = vpop.xlane.xlu0 %1333
    %1335 = vadd.xlane.f32.xlu0 %v1272
    %v1336 = vpop.xlane.xlu0 %1335
    %1337 = vadd.xlane.f32.xlu0 %v1274
    %v1338 = vpop.xlane.xlu0 %1337
    %1339 = vadd.xlane.f32.xlu0 %v1276
    %v1340 = vpop.xlane.xlu0 %1339
    %1341 = vadd.xlane.f32.xlu0 %v1278
    %v1342 = vpop.xlane.xlu0 %1341
    %1343 = vadd.xlane.f32.xlu0 %v1280
    %v1344 = vpop.xlane.xlu0 %1343
    %1345 = vadd.xlane.f32.xlu0 %v1282
    %v1346 = vpop.xlane.xlu0 %1345
    %1347 = vadd.xlane.f32.xlu0 %v1284
    %v1348 = vpop.xlane.xlu0 %1347
    %1349 = vadd.xlane.f32.xlu0 %v1286
    %v1350 = vpop.xlane.xlu0 %1349
    %1351 = vadd.xlane.f32.xlu0 %v1288
    %v1352 = vpop.xlane.xlu0 %1351
    %1353 = vadd.xlane.f32.xlu0 %v1290
    %v1354 = vpop.xlane.xlu0 %1353
    %1355 = vadd.xlane.f32.xlu0 %v1292
    %v1356 = vpop.xlane.xlu0 %1355
    %1357 = vadd.xlane.f32.xlu0 %v1294
    %v1358 = vpop.xlane.xlu0 %1357
    %1359 = vadd.xlane.f32.xlu0 %v1296
    %v1360 = vpop.xlane.xlu0 %1359
    %1361 = vadd.xlane.f32.xlu0 %v1298
    %v1362 = vpop.xlane.xlu0 %1361
    %1363 = vadd.xlane.f32.xlu0 %v1300
    %v1364 = vpop.xlane.xlu0 %1363
    %1365 = vadd.xlane.f32.xlu0 %v1302
    %v1366 = vpop.xlane.xlu0 %1365
    %1367 = vmatpush.msra.mxu0 %v832
    %1368 = vmatpush.msra.mxu0 %v829
    %1369 = vmatpush.msra.mxu0 %v826
    %1370 = vmatpush.msra.mxu0 %v823
    %1371 = vmatpush.msra.mxu0 %v820
    %1372 = vmatpush.msra.mxu0 %v817
    %1373 = vmatpush.msra.mxu0 %v814
    %1374 = vmatpush.msra.mxu0 %v811
    %1375 = vmatpush.msra.mxu0 %v808
    %1376 = vmatpush.msra.mxu0 %v805
    %1377 = vmatpush.msra.mxu0 %v802
    %1378 = vmatpush.msra.mxu0 %v799
    %1379 = vmatpush.msra.mxu0 %v796
    %1380 = vmatpush.msra.mxu0 %v793
    %1381 = vmatpush.msra.mxu0 %v790
    %1382 = vmatpush.msra.mxu0 %v787
    %1383 = vmatmul.f32.gmra.mxu0 %v1240
    %v1384 = vpop.f32.mrf.mxu0
    %v1385 = vadd.f32 0.0, %v1384
    %1386 = vmatmul.f32.gmra.mxu0 %v1242
    %v1387 = vpop.f32.mrf.mxu0
    %v1388 = vadd.f32 0.0, %v1387
    %1389 = vmatmul.f32.gmra.mxu0 %v1244
    %v1390 = vpop.f32.mrf.mxu0
    %v1391 = vadd.f32 0.0, %v1390
    %1392 = vmatmul.f32.gmra.mxu0 %v1246
    %v1393 = vpop.f32.mrf.mxu0
    %v1394 = vadd.f32 0.0, %v1393
    %1395 = vmatmul.f32.gmra.mxu0 %v1248
    %v1396 = vpop.f32.mrf.mxu0
    %v1397 = vadd.f32 0.0, %v1396
    %1398 = vmatmul.f32.gmra.mxu0 %v1250
    %v1399 = vpop.f32.mrf.mxu0
    %v1400 = vadd.f32 0.0, %v1399
    %1401 = vmatmul.f32.gmra.mxu0 %v1252
    %v1402 = vpop.f32.mrf.mxu0
    %v1403 = vadd.f32 0.0, %v1402
    %1404 = vmatmul.f32.gmra.mxu0 %v1254
    %v1405 = vpop.f32.mrf.mxu0
    %v1406 = vadd.f32 0.0, %v1405
    %1407 = vmatmul.f32.gmra.mxu0 %v1256
    %v1408 = vpop.f32.mrf.mxu0
    %v1409 = vadd.f32 0.0, %v1408
    %1410 = vmatmul.f32.gmra.mxu0 %v1258
    %v1411 = vpop.f32.mrf.mxu0
    %v1412 = vadd.f32 0.0, %v1411
    %1413 = vmatmul.f32.gmra.mxu0 %v1260
    %v1414 = vpop.f32.mrf.mxu0
    %v1415 = vadd.f32 0.0, %v1414
    %1416 = vmatmul.f32.gmra.mxu0 %v1262
    %v1417 = vpop.f32.mrf.mxu0
    %v1418 = vadd.f32 0.0, %v1417
    %1419 = vmatmul.f32.gmra.mxu0 %v1264
    %v1420 = vpop.f32.mrf.mxu0
    %v1421 = vadd.f32 0.0, %v1420
    %1422 = vmatmul.f32.gmra.mxu0 %v1266
    %v1423 = vpop.f32.mrf.mxu0
    %v1424 = vadd.f32 0.0, %v1423
    %1425 = vmatmul.f32.gmra.mxu0 %v1268
    %v1426 = vpop.f32.mrf.mxu0
    %v1427 = vadd.f32 0.0, %v1426
    %1428 = vmatmul.f32.gmra.mxu0 %v1270
    %v1429 = vpop.f32.mrf.mxu0
    %v1430 = vadd.f32 0.0, %v1429
    %1431 = vdwg.mxu0
    %1432 = vmatpush.msra.mxu0 %v880
    %1433 = vmatpush.msra.mxu0 %v877
    %1434 = vmatpush.msra.mxu0 %v874
    %1435 = vmatpush.msra.mxu0 %v871
    %1436 = vmatpush.msra.mxu0 %v868
    %1437 = vmatpush.msra.mxu0 %v865
    %1438 = vmatpush.msra.mxu0 %v862
    %1439 = vmatpush.msra.mxu0 %v859
    %1440 = vmatpush.msra.mxu0 %v856
    %1441 = vmatpush.msra.mxu0 %v853
    %1442 = vmatpush.msra.mxu0 %v850
    %1443 = vmatpush.msra.mxu0 %v847
    %1444 = vmatpush.msra.mxu0 %v844
    %1445 = vmatpush.msra.mxu0 %v841
    %1446 = vmatpush.msra.mxu0 %v838
    %1447 = vmatpush.msra.mxu0 %v835
    %1448 = vmatmul.f32.gmra.mxu0 %v1272
    %v1449 = vpop.f32.mrf.mxu0
    %v1450 = vadd.f32 0.0, %v1449
    %1451 = vmatmul.f32.gmra.mxu0 %v1274
    %v1452 = vpop.f32.mrf.mxu0
    %v1453 = vadd.f32 0.0, %v1452
    %1454 = vmatmul.f32.gmra.mxu0 %v1276
    %v1455 = vpop.f32.mrf.mxu0
    %v1456 = vadd.f32 0.0, %v1455
    %1457 = vmatmul.f32.gmra.mxu0 %v1278
    %v1458 = vpop.f32.mrf.mxu0
    %v1459 = vadd.f32 0.0, %v1458
    %1460 = vmatmul.f32.gmra.mxu0 %v1280
    %v1461 = vpop.f32.mrf.mxu0
    %v1462 = vadd.f32 0.0, %v1461
    %1463 = vmatmul.f32.gmra.mxu0 %v1282
    %v1464 = vpop.f32.mrf.mxu0
    %v1465 = vadd.f32 0.0, %v1464
    %1466 = vmatmul.f32.gmra.mxu0 %v1284
    %v1467 = vpop.f32.mrf.mxu0
    %v1468 = vadd.f32 0.0, %v1467
    %1469 = vmatmul.f32.gmra.mxu0 %v1286
    %v1470 = vpop.f32.mrf.mxu0
    %v1471 = vadd.f32 0.0, %v1470
    %1472 = vmatmul.f32.gmra.mxu0 %v1288
    %v1473 = vpop.f32.mrf.mxu0
    %v1474 = vadd.f32 0.0, %v1473
    %1475 = vmatmul.f32.gmra.mxu0 %v1290
    %v1476 = vpop.f32.mrf.mxu0
    %v1477 = vadd.f32 0.0, %v1476
    %1478 = vmatmul.f32.gmra.mxu0 %v1292
    %v1479 = vpop.f32.mrf.mxu0
    %v1480 = vadd.f32 0.0, %v1479
    %1481 = vmatmul.f32.gmra.mxu0 %v1294
    %v1482 = vpop.f32.mrf.mxu0
    %v1483 = vadd.f32 0.0, %v1482
    %1484 = vmatmul.f32.gmra.mxu0 %v1296
    %v1485 = vpop.f32.mrf.mxu0
    %v1486 = vadd.f32 0.0, %v1485
    %1487 = vmatmul.f32.gmra.mxu0 %v1298
    %v1488 = vpop.f32.mrf.mxu0
    %v1489 = vadd.f32 0.0, %v1488
    %1490 = vmatmul.f32.gmra.mxu0 %v1300
    %v1491 = vpop.f32.mrf.mxu0
    %v1492 = vadd.f32 0.0, %v1491
    %1493 = vmatmul.f32.gmra.mxu0 %v1302
    %v1494 = vpop.f32.mrf.mxu0
    %v1495 = vadd.f32 0.0, %v1494
    %1496 = vdwg.mxu0
    %v1497 = vrcp.pop %v1304
    %v1498 = vrcp.pop %v1306
    %v1499 = vrcp.pop %v1308
    %v1500 = vrcp.pop %v1310
    %v1501 = vrcp.pop %v1312
    %v1502 = vrcp.pop %v1314
    %v1503 = vrcp.pop %v1316
    %v1504 = vrcp.pop %v1318
    %v1505 = vrcp.pop %v1320
    %v1506 = vrcp.pop %v1322
    %v1507 = vrcp.pop %v1324
    %v1508 = vrcp.pop %v1326
    %v1509 = vrcp.pop %v1328
    %v1510 = vrcp.pop %v1330
    %v1511 = vrcp.pop %v1332
    %v1512 = vrcp.pop %v1334
    %v1513 = vrcp.pop %v1336
    %v1514 = vrcp.pop %v1338
    %v1515 = vrcp.pop %v1340
    %v1516 = vrcp.pop %v1342
    %v1517 = vrcp.pop %v1344
    %v1518 = vrcp.pop %v1346
    %v1519 = vrcp.pop %v1348
    %v1520 = vrcp.pop %v1350
    %v1521 = vrcp.pop %v1352
    %v1522 = vrcp.pop %v1354
    %v1523 = vrcp.pop %v1356
    %v1524 = vrcp.pop %v1358
    %v1525 = vrcp.pop %v1360
    %v1526 = vrcp.pop %v1362
    %v1527 = vrcp.pop %v1364
    %v1528 = vrcp.pop %v1366
    %v1529 = vmul.f32 %v1304, %v1497
    %v1530 = vmul.f32 %v1306, %v1498
    %v1531 = vmul.f32 %v1308, %v1499
    %v1532 = vmul.f32 %v1310, %v1500
    %v1533 = vmul.f32 %v1312, %v1501
    %v1534 = vmul.f32 %v1314, %v1502
    %v1535 = vmul.f32 %v1316, %v1503
    %v1536 = vmul.f32 %v1318, %v1504
    %v1537 = vmul.f32 %v1320, %v1505
    %v1538 = vmul.f32 %v1322, %v1506
    %v1539 = vmul.f32 %v1324, %v1507
    %v1540 = vmul.f32 %v1326, %v1508
    %v1541 = vmul.f32 %v1328, %v1509
    %v1542 = vmul.f32 %v1330, %v1510
    %v1543 = vmul.f32 %v1332, %v1511
    %v1544 = vmul.f32 %v1334, %v1512
    %v1545 = vmul.f32 %v1336, %v1513
    %v1546 = vmul.f32 %v1338, %v1514
    %v1547 = vmul.f32 %v1340, %v1515
    %v1548 = vmul.f32 %v1342, %v1516
    %v1549 = vmul.f32 %v1344, %v1517
    %v1550 = vmul.f32 %v1346, %v1518
    %v1551 = vmul.f32 %v1348, %v1519
    %v1552 = vmul.f32 %v1350, %v1520
    %v1553 = vmul.f32 %v1352, %v1521
    %v1554 = vmul.f32 %v1354, %v1522
    %v1555 = vmul.f32 %v1356, %v1523
    %v1556 = vmul.f32 %v1358, %v1524
    %v1557 = vmul.f32 %v1360, %v1525
    %v1558 = vmul.f32 %v1362, %v1526
    %v1559 = vmul.f32 %v1364, %v1527
    %v1560 = vmul.f32 %v1366, %v1528
    %v1561 = vsub.f32 2.0, %v1529
    %v1562 = vsub.f32 2.0, %v1530
    %v1563 = vsub.f32 2.0, %v1531
    %v1564 = vsub.f32 2.0, %v1532
    %v1565 = vsub.f32 2.0, %v1533
    %v1566 = vsub.f32 2.0, %v1534
    %v1567 = vsub.f32 2.0, %v1535
    %v1568 = vsub.f32 2.0, %v1536
    %v1569 = vsub.f32 2.0, %v1537
    %v1570 = vsub.f32 2.0, %v1538
    %v1571 = vsub.f32 2.0, %v1539
    %v1572 = vsub.f32 2.0, %v1540
    %v1573 = vsub.f32 2.0, %v1541
    %v1574 = vsub.f32 2.0, %v1542
    %v1575 = vsub.f32 2.0, %v1543
    %v1576 = vsub.f32 2.0, %v1544
    %v1577 = vsub.f32 2.0, %v1545
    %v1578 = vsub.f32 2.0, %v1546
    %v1579 = vsub.f32 2.0, %v1547
    %v1580 = vsub.f32 2.0, %v1548
    %v1581 = vsub.f32 2.0, %v1549
    %v1582 = vsub.f32 2.0, %v1550
    %v1583 = vsub.f32 2.0, %v1551
    %v1584 = vsub.f32 2.0, %v1552
    %v1585 = vsub.f32 2.0, %v1553
    %v1586 = vsub.f32 2.0, %v1554
    %v1587 = vsub.f32 2.0, %v1555
    %v1588 = vsub.f32 2.0, %v1556
    %v1589 = vsub.f32 2.0, %v1557
    %v1590 = vsub.f32 2.0, %v1558
    %v1591 = vsub.f32 2.0, %v1559
    %v1592 = vsub.f32 2.0, %v1560
    %v1593 = vmul.f32 %v1497, %v1561
    %v1594 = vmul.f32 %v1498, %v1562
    %v1595 = vmul.f32 %v1499, %v1563
    %v1596 = vmul.f32 %v1500, %v1564
    %v1597 = vmul.f32 %v1501, %v1565
    %v1598 = vmul.f32 %v1502, %v1566
    %v1599 = vmul.f32 %v1503, %v1567
    %v1600 = vmul.f32 %v1504, %v1568
    %v1601 = vmul.f32 %v1505, %v1569
    %v1602 = vmul.f32 %v1506, %v1570
    %v1603 = vmul.f32 %v1507, %v1571
    %v1604 = vmul.f32 %v1508, %v1572
    %v1605 = vmul.f32 %v1509, %v1573
    %v1606 = vmul.f32 %v1510, %v1574
    %v1607 = vmul.f32 %v1511, %v1575
    %v1608 = vmul.f32 %v1512, %v1576
    %v1609 = vmul.f32 %v1513, %v1577
    %v1610 = vmul.f32 %v1514, %v1578
    %v1611 = vmul.f32 %v1515, %v1579
    %v1612 = vmul.f32 %v1516, %v1580
    %v1613 = vmul.f32 %v1517, %v1581
    %v1614 = vmul.f32 %v1518, %v1582
    %v1615 = vmul.f32 %v1519, %v1583
    %v1616 = vmul.f32 %v1520, %v1584
    %v1617 = vmul.f32 %v1521, %v1585
    %v1618 = vmul.f32 %v1522, %v1586
    %v1619 = vmul.f32 %v1523, %v1587
    %v1620 = vmul.f32 %v1524, %v1588
    %v1621 = vmul.f32 %v1525, %v1589
    %v1622 = vmul.f32 %v1526, %v1590
    %v1623 = vmul.f32 %v1527, %v1591
    %v1624 = vmul.f32 %v1528, %v1592
    %v1625 = vmul.f32 %v1385, %v1593
    %v1626 = vmul.f32 %v1388, %v1594
    %v1627 = vmul.f32 %v1391, %v1595
    %v1628 = vmul.f32 %v1394, %v1596
    %v1629 = vmul.f32 %v1397, %v1597
    %v1630 = vmul.f32 %v1400, %v1598
    %v1631 = vmul.f32 %v1403, %v1599
    %v1632 = vmul.f32 %v1406, %v1600
    %v1633 = vmul.f32 %v1409, %v1601
    %v1634 = vmul.f32 %v1412, %v1602
    %v1635 = vmul.f32 %v1415, %v1603
    %v1636 = vmul.f32 %v1418, %v1604
    %v1637 = vmul.f32 %v1421, %v1605
    %v1638 = vmul.f32 %v1424, %v1606
    %v1639 = vmul.f32 %v1427, %v1607
    %v1640 = vmul.f32 %v1430, %v1608
    %v1641 = vmul.f32 %v1450, %v1609
    %v1642 = vmul.f32 %v1453, %v1610
    %v1643 = vmul.f32 %v1456, %v1611
    %v1644 = vmul.f32 %v1459, %v1612
    %v1645 = vmul.f32 %v1462, %v1613
    %v1646 = vmul.f32 %v1465, %v1614
    %v1647 = vmul.f32 %v1468, %v1615
    %v1648 = vmul.f32 %v1471, %v1616
    %v1649 = vmul.f32 %v1474, %v1617
    %v1650 = vmul.f32 %v1477, %v1618
    %v1651 = vmul.f32 %v1480, %v1619
    %v1652 = vmul.f32 %v1483, %v1620
    %v1653 = vmul.f32 %v1486, %v1621
    %v1654 = vmul.f32 %v1489, %v1622
    %v1655 = vmul.f32 %v1492, %v1623
    %v1656 = vmul.f32 %v1495, %v1624
    %1657 = vst [vmem:[#allocation7] sm:$0xff] %v1625
    %1658 = vst [vmem:[#allocation7 + $0x8] sm:$0xff] %v1626
    %1659 = vst [vmem:[#allocation7 + $0x10] sm:$0xff] %v1627
    %1660 = vst [vmem:[#allocation7 + $0x18] sm:$0xff] %v1628
    %1661 = vst [vmem:[#allocation7 + $0x20] sm:$0xff] %v1629
    %1662 = vst [vmem:[#allocation7 + $0x28] sm:$0xff] %v1630
    %1663 = vst [vmem:[#allocation7 + $0x30] sm:$0xff] %v1631
    %1664 = vst [vmem:[#allocation7 + $0x38] sm:$0xff] %v1632
    %1665 = vst [vmem:[#allocation7 + $0x40] sm:$0xff] %v1633
    %1666 = vst [vmem:[#allocation7 + $0x48] sm:$0xff] %v1634
    %1667 = vst [vmem:[#allocation7 + $0x50] sm:$0xff] %v1635
    %1668 = vst [vmem:[#allocation7 + $0x58] sm:$0xff] %v1636
    %1669 = vst [vmem:[#allocation7 + $0x60] sm:$0xff] %v1637
    %1670 = vst [vmem:[#allocation7 + $0x68] sm:$0xff] %v1638
    %1671 = vst [vmem:[#allocation7 + $0x70] sm:$0xff] %v1639
    %1672 = vst [vmem:[#allocation7 + $0x78] sm:$0xff] %v1640
    %1673 = vst [vmem:[#allocation7 + $0x80] sm:$0xff] %v1641
    %1674 = vst [vmem:[#allocation7 + $0x88] sm:$0xff] %v1642
    %1675 = vst [vmem:[#allocation7 + $0x90] sm:$0xff] %v1643
    %1676 = vst [vmem:[#allocation7 + $0x98] sm:$0xff] %v1644
    %1677 = vst [vmem:[#allocation7 + $0xa0] sm:$0xff] %v1645
    %1678 = vst [vmem:[#allocation7 + $0xa8] sm:$0xff] %v1646
    %1679 = vst [vmem:[#allocation7 + $0xb0] sm:$0xff] %v1647
    %1680 = vst [vmem:[#allocation7 + $0xb8] sm:$0xff] %v1648
    %1681 = vst [vmem:[#allocation7 + $0xc0] sm:$0xff] %v1649
    %1682 = vst [vmem:[#allocation7 + $0xc8] sm:$0xff] %v1650
    %1683 = vst [vmem:[#allocation7 + $0xd0] sm:$0xff] %v1651
    %1684 = vst [vmem:[#allocation7 + $0xd8] sm:$0xff] %v1652
    %1685 = vst [vmem:[#allocation7 + $0xe0] sm:$0xff] %v1653
    %1686 = vst [vmem:[#allocation7 + $0xe8] sm:$0xff] %v1654
    %1687 = vst [vmem:[#allocation7 + $0xf0] sm:$0xff] %v1655
    %1688 = vst [vmem:[#allocation7 + $0xf8] sm:$0xff] %v1656
    // Predicated region
    $region18: #{tpu_custom_call.1} parent=1 // pred_check
      _
    $region19: #{tpu_custom_call.1} parent=1 // pred_check_branch
      %1690 = sbr.rel (0) target = $region21
    $region20: #{tpu_custom_call.1} parent=1 // pred_region
      %1692 = vsyncadd [#allocation4], 0
      %s1693 = sshll.u32 [#allocation7], 4
      %s1694 = int_to_ptr.vmem [resolvable:$true] %s1693
      %s1695 = sshll.u32 %s2, 4
      %s1696 = int_to_ptr.hbm [resolvable:$true] %s1695
      %1701 = dma.vmem_to_hbm [thread:$0]  %s1694, 4096, %s1696, [#allocation4], 128, 128, 8
    $region21: #{tpu_custom_call.1} parent=1 // pred_fallthru
      _
    // Predicated region
    $region22: #{tpu_custom_call.1} parent=1 // pred_check
      _
    $region23: #{tpu_custom_call.1} parent=1 // pred_check_branch
      %1703 = sbr.rel (0) target = $region25
    $region24: #{tpu_custom_call.1} parent=1 // pred_region
      %1705 = dma.done [#allocation4], 4096
    $region25: #{tpu_custom_call.1} parent=1 // pred_fallthru
      _
    %1706 = vsyncpa [#allocation3], 1
    %1707 = vsyncpa [#allocation6], 1
    %1708 = vsyncpa [#allocation4], 1

</llo_original>
